<compile_context>
chip_gen: v6e
topology: v6e:2x2x1
jax: 0.10.0
libtpu: 0.0.40
codegen_flags: <defaults>
</compile_context>

<pallas_src>
import functools

import jax
import jax.numpy as jnp
from jax.experimental import pallas as pl
from jax.experimental.pallas import tpu as pltpu

# HIVPatient environment: observation dim = 6, action dim = 4.
STATE_DIM = 6
N_ACTION = 4
NB_NEURONS = 256

# Padded dims for TPU alignment.
IN_PAD = 8     # sublane-aligned input/state dim (block last dim == full dim)
OUT_PAD = 128  # lane-aligned output dim (padded head columns sliced off)

# Batches at or below this use the grid=(1,) manual-DMA latency path.
SMALL_BATCH_MAX = 128


def dqn_kernel(x_ref,
               w1, b1, w2, b2, w3, b3, w4, b4, w5, b5, w6, b6,
               o_ref):
    """One batch tile of the 6-layer MLP (5 hidden ReLU layers + linear head).

    Single full-width chain per layer (no half-split): each 256-wide RHS is
    staged on the MXU exactly once per layer.  Layer 1 runs in f32; hidden
    layers run bf16 x bf16 with f32 accumulation.
    """
    h = jnp.dot(x_ref[...], w1[...], preferred_element_type=jnp.float32) + b1[...]
    h = jnp.maximum(h, 0.0).astype(jnp.bfloat16)

    ws = (w2, w3, w4, w5, w6)
    bs = (b2, b3, b4, b5, b6)
    for i in range(5):
        y = jnp.dot(h, ws[i][...], preferred_element_type=jnp.float32) + bs[i][...]
        if i < 4:
            h = jnp.maximum(y, 0.0).astype(jnp.bfloat16)
        else:
            o_ref[...] = y.astype(o_ref.dtype)


def dqn_small_kernel(x_ref,
                     w1, b1, w2_hbm, b2, w3_hbm, b3, w4_hbm, b4,
                     w5_hbm, b5, w6_hbm, b6,
                     o_ref,
                     w2b, w3b, w4b, w5b, w6b, sem):
    """grid=(1,) inference path.

    Hidden/head weights (the bulk of the bytes) stay in HBM and are DMA'd into
    VMEM scratch here, so layer i+1's weight transfer overlaps layer i's
    compute instead of all operands being serialized before the body runs.
    """
    hbm_ws = (w2_hbm, w3_hbm, w4_hbm, w5_hbm, w6_hbm)
    bufs = (w2b, w3b, w4b, w5b, w6b)

    copies = [pltpu.make_async_copy(hbm_ws[i], bufs[i], sem.at[i])
              for i in range(5)]
    for c in copies:
        c.start()

    # Layer 1 in f32 while layer-2's weights stream in.
    h = jnp.dot(x_ref[...], w1[...], preferred_element_type=jnp.float32) + b1[...]
    h = jnp.maximum(h, 0.0).astype(jnp.bfloat16)

    bs = (b2, b3, b4, b5, b6)
    for i in range(5):
        copies[i].wait()
        y = jnp.dot(h, bufs[i][...], preferred_element_type=jnp.float32) + bs[i][...]
        if i < 4:
            h = jnp.maximum(y, 0.0).astype(jnp.bfloat16)
        else:
            o_ref[...] = y.astype(o_ref.dtype)


def init_params(key, state_dim=STATE_DIM, n_action=N_ACTION, nb_neurons=NB_NEURONS):
    """Deterministic init (PyTorch-Linear-style uniform ±1/sqrt(fan_in)), f32."""
    dims = [state_dim, nb_neurons, nb_neurons, nb_neurons, nb_neurons, nb_neurons,
            n_action]
    params = []
    for i in range(6):
        fan_in, fan_out = dims[i], dims[i + 1]
        key, kw, kb = jax.random.split(key, 3)
        bound = 1.0 / jnp.sqrt(jnp.float32(fan_in))
        w = jax.random.uniform(kw, (fan_in, fan_out), jnp.float32, -bound, bound)
        b = jax.random.uniform(kb, (1, fan_out), jnp.float32, -bound, bound)
        params.append((w, b))
    return params


def pad_params(params):
    """Pad first-layer input dim to 8 and last-layer output dim to 128.

    Layer-1 weight stays f32 (unnormalized observations keep full precision);
    hidden/head weights are cast to bf16; all biases stay f32 (added to the
    f32 accumulator)."""
    padded = []
    for i, (w, b) in enumerate(params):
        if i == 0:
            w = jnp.pad(w, ((0, IN_PAD - w.shape[0]), (0, 0)))
            padded.append((w.astype(jnp.float32), b.astype(jnp.float32)))
            continue
        if i == 5:
            w = jnp.pad(w, ((0, 0), (0, OUT_PAD - w.shape[1])))
            b = jnp.pad(b, ((0, 0), (0, OUT_PAD - b.shape[1])))
        padded.append((w.astype(jnp.bfloat16), b.astype(jnp.float32)))
    return padded


def _round_up(n, m):
    return ((n + m - 1) // m) * m


@functools.partial(jax.jit, static_argnames=("tile_m",))
def dqn_forward(x, padded_params, tile_m=256):
    """x: (B, STATE_DIM) float32 -> (B, N_ACTION) float32.

    B <= SMALL_BATCH_MAX: single block, manual in-kernel weight DMA overlap.
    Otherwise: >= 2 parallel batch tiles (both v7x TensorCores get work) with
    single-buffered (Buffered(1)) grid-constant weights.
    """
    B, d = x.shape
    small = B <= SMALL_BATCH_MAX

    if small:
        n_tiles = 1
        TM = _round_up(max(B, 16), 16)
    else:
        n_tiles = max(2, -(-B // tile_m))          # at least 2 grid steps
        TM = _round_up(-(-B // n_tiles), 16)
    B_pad = TM * n_tiles

    x_pad = jnp.pad(x, ((0, B_pad - B), (0, IN_PAD - d)))

    flat_params = []
    for w, b in padded_params:
        flat_params += [w, b]

    def const_spec(p):
        # Grid-constant operand: block index never changes, so single-buffer it
        # (no redundant double-buffer VMEM, no re-DMA across grid steps).
        return pl.BlockSpec(p.shape, lambda i: (0, 0),
                            pipeline_mode=pl.Buffered(1))

    x_spec = pl.BlockSpec((TM, IN_PAD), lambda i: (i, 0))
    out_spec = pl.BlockSpec((TM, OUT_PAD), lambda i: (i, 0))

    # Advisory cost estimate: 2 * rows * sum_k(in_k * out_k) flops.
    per_row_flops = 2 * (IN_PAD * NB_NEURONS
                         + 4 * NB_NEURONS * NB_NEURONS
                         + NB_NEURONS * OUT_PAD)
    param_bytes = sum(int(p.size) * p.dtype.itemsize for p in flat_params)
    bytes_accessed = (param_bytes
                      + int(x_pad.size) * x_pad.dtype.itemsize
                      + B_pad * OUT_PAD * 4)
    cost = pl.CostEstimate(flops=per_row_flops * B_pad,
                           transcendentals=0,
                           bytes_accessed=bytes_accessed)

    if small:
        # w2..w6 (flat indices 2,4,6,8,10) stay in HBM; the kernel DMAs them.
        hbm_idx = {2, 4, 6, 8, 10}
        in_specs = [x_spec] + [
            pl.BlockSpec(memory_space=pl.ANY) if i in hbm_idx else const_spec(p)
            for i, p in enumerate(flat_params)]
        scratch = ([pltpu.VMEM((NB_NEURONS, NB_NEURONS), jnp.bfloat16)
                    for _ in range(4)]
                   + [pltpu.VMEM((NB_NEURONS, OUT_PAD), jnp.bfloat16),
                      pltpu.SemaphoreType.DMA((5,))])
        kernel = dqn_small_kernel
        dim_sem = ("arbitrary",)
    else:
        in_specs = [x_spec] + [const_spec(p) for p in flat_params]
        scratch = []
        kernel = dqn_kernel
        dim_sem = ("parallel",)

    out_pad = pl.pallas_call(
        kernel,
        out_shape=jax.ShapeDtypeStruct((B_pad, OUT_PAD), jnp.float32),
        grid_spec=pltpu.PrefetchScalarGridSpec(
            num_scalar_prefetch=0,
            grid=(n_tiles,),
            in_specs=in_specs,
            out_specs=out_spec,
            scratch_shapes=scratch),
        compiler_params=pltpu.CompilerParams(
            dimension_semantics=dim_sem,
            vmem_limit_bytes=32 * 1024 * 1024),
        cost_estimate=cost,
    )(x_pad, *flat_params)

    return out_pad[:B, :N_ACTION]


def dqn_reference(x, params):
    """Pure-JAX f32 reference of the PyTorch forward."""
    h = x
    for i, (w, b) in enumerate(params):
        h = h @ w + b
        if i < 5:
            h = jnp.maximum(h, 0.0)
    return h


def dqn_reference_matched(x, padded_params):
    """Pure-JAX reference matching the kernel's numerics (f32 layer 1, bf16
    hidden layers with f32 accumulation)."""
    h = jnp.pad(x, ((0, 0), (0, IN_PAD - x.shape[1])))
    w1, b1 = padded_params[0]
    h = jnp.dot(h, w1, preferred_element_type=jnp.float32) + b1
    h = jnp.maximum(h, 0.0)
    for i in range(1, 6):
        w, b = padded_params[i]
        h = jnp.dot(h.astype(jnp.bfloat16), w,
                    preferred_element_type=jnp.float32) + b
        if i < 5:
            h = jnp.maximum(h, 0.0)
    return h[:, :N_ACTION]


if __name__ == "__main__":
    key = jax.random.PRNGKey(0)
    kx, kp = jax.random.split(key)

    params = init_params(kp)          # f32 (original module semantics)
    padded = pad_params(params)       # f32 layer-1 / bf16 hidden, padded dims

    # --- Small-batch (action-selection) path: grid=(1,), manual weight DMA ---
    B_small = 32
    x_small = jax.random.normal(kx, (B_small, STATE_DIM), jnp.float32)
    out_small = jax.block_until_ready(dqn_forward(x_small, padded))
    assert out_small.shape == (B_small, N_ACTION)
    ref = dqn_reference(x_small, params)
    assert jnp.allclose(out_small, ref, atol=5e-2, rtol=5e-2), "small: vs f32 ref"
    refm = dqn_reference_matched(x_small, padded)
    assert jnp.allclose(out_small, refm, atol=2e-2, rtol=2e-2), "small: vs matched ref"

    # --- Replay-buffer path: >=2 parallel tiles, Buffered(1) weights ---
    B_big = 384
    x_big = jax.random.normal(jax.random.PRNGKey(1), (B_big, STATE_DIM), jnp.float32)
    out_big = jax.block_until_ready(dqn_forward(x_big, padded))
    assert out_big.shape == (B_big, N_ACTION)
    ref_big = dqn_reference(x_big, params)
    assert jnp.allclose(out_big, ref_big, atol=5e-2, rtol=5e-2), "big: vs f32 ref"
    refm_big = dqn_reference_matched(x_big, padded)
    assert jnp.allclose(out_big, refm_big, atol=2e-2, rtol=2e-2), "big: vs matched ref"

    print("KERNEL_OK")
</pallas_src>

<mosaic_0001>
module attributes {stable_mosaic.version = 11 : i64} {
  func.func @dqn_small_kernel(%arg0: i32, %arg1: memref<32x8xf32, #tpu.memory_space<vmem>>, %arg2: memref<8x256xf32, #tpu.memory_space<vmem>>, %arg3: memref<1x256xf32, #tpu.memory_space<vmem>>, %arg4: memref<256x256xbf16, #tpu.memory_space<any>>, %arg5: memref<1x256xf32, #tpu.memory_space<vmem>>, %arg6: memref<256x256xbf16, #tpu.memory_space<any>>, %arg7: memref<1x256xf32, #tpu.memory_space<vmem>>, %arg8: memref<256x256xbf16, #tpu.memory_space<any>>, %arg9: memref<1x256xf32, #tpu.memory_space<vmem>>, %arg10: memref<256x256xbf16, #tpu.memory_space<any>>, %arg11: memref<1x256xf32, #tpu.memory_space<vmem>>, %arg12: memref<256x128xbf16, #tpu.memory_space<any>>, %arg13: memref<1x128xf32, #tpu.memory_space<vmem>>, %arg14: memref<32x128xf32, #tpu.memory_space<vmem>>, %arg15: memref<256x256xbf16, #tpu.memory_space<vmem>>, %arg16: memref<256x256xbf16, #tpu.memory_space<vmem>>, %arg17: memref<256x256xbf16, #tpu.memory_space<vmem>>, %arg18: memref<256x256xbf16, #tpu.memory_space<vmem>>, %arg19: memref<256x128xbf16, #tpu.memory_space<vmem>>, %arg20: memref<5x!tpu.dma_semaphore, #tpu.memory_space<semaphore_mem>>) attributes {dimension_semantics = [#tpu.dimension_semantics<arbitrary>], iteration_bounds = array<i64: 1>, scalar_prefetch = 0 : i64, scratch_operands = 6 : i64, tpu.core_type = #tpu.core_type<tc>, window_params = [{transform_indices = @transform_0, window_bounds = array<i64: 32, 8>}, {pipeline_mode = #tpu.pipeline_mode<synchronous>, transform_indices = @transform_1, window_bounds = array<i64: 8, 256>}, {pipeline_mode = #tpu.pipeline_mode<synchronous>, transform_indices = @transform_2, window_bounds = array<i64: 1, 256>}, {}, {pipeline_mode = #tpu.pipeline_mode<synchronous>, transform_indices = @transform_4, window_bounds = array<i64: 1, 256>}, {}, {pipeline_mode = #tpu.pipeline_mode<synchronous>, transform_indices = @transform_6, window_bounds = array<i64: 1, 256>}, {}, {pipeline_mode = #tpu.pipeline_mode<synchronous>, transform_indices = @transform_8, window_bounds = array<i64: 1, 256>}, {}, {pipeline_mode = #tpu.pipeline_mode<synchronous>, transform_indices = @transform_10, window_bounds = array<i64: 1, 256>}, {}, {pipeline_mode = #tpu.pipeline_mode<synchronous>, transform_indices = @transform_12, window_bounds = array<i64: 1, 128>}, {transform_indices = @transform_13, window_bounds = array<i64: 32, 128>}]} {
    %c0_i32 = arith.constant 0 : i32
    %0 = tpu.memref_slice %arg20[%c0_i32] : memref<5x!tpu.dma_semaphore, #tpu.memory_space<semaphore_mem>> -> memref<1x!tpu.dma_semaphore, #tpu.memory_space<semaphore_mem>>
    %1 = tpu.memref_squeeze %0 : memref<1x!tpu.dma_semaphore, #tpu.memory_space<semaphore_mem>> -> memref<!tpu.dma_semaphore, #tpu.memory_space<semaphore_mem>>
    tpu.enqueue_dma source(%arg4 : memref<256x256xbf16, #tpu.memory_space<any>>) target(%arg15 : memref<256x256xbf16, #tpu.memory_space<vmem>>) target_semaphore(%1 : memref<!tpu.dma_semaphore, #tpu.memory_space<semaphore_mem>>)
    %c1_i32 = arith.constant 1 : i32
    %2 = tpu.memref_slice %arg20[%c1_i32] : memref<5x!tpu.dma_semaphore, #tpu.memory_space<semaphore_mem>> -> memref<1x!tpu.dma_semaphore, #tpu.memory_space<semaphore_mem>>
    %3 = tpu.memref_squeeze %2 : memref<1x!tpu.dma_semaphore, #tpu.memory_space<semaphore_mem>> -> memref<!tpu.dma_semaphore, #tpu.memory_space<semaphore_mem>>
    tpu.enqueue_dma source(%arg6 : memref<256x256xbf16, #tpu.memory_space<any>>) target(%arg16 : memref<256x256xbf16, #tpu.memory_space<vmem>>) target_semaphore(%3 : memref<!tpu.dma_semaphore, #tpu.memory_space<semaphore_mem>>)
    %c2_i32 = arith.constant 2 : i32
    %4 = tpu.memref_slice %arg20[%c2_i32] : memref<5x!tpu.dma_semaphore, #tpu.memory_space<semaphore_mem>> -> memref<1x!tpu.dma_semaphore, #tpu.memory_space<semaphore_mem>>
    %5 = tpu.memref_squeeze %4 : memref<1x!tpu.dma_semaphore, #tpu.memory_space<semaphore_mem>> -> memref<!tpu.dma_semaphore, #tpu.memory_space<semaphore_mem>>
    tpu.enqueue_dma source(%arg8 : memref<256x256xbf16, #tpu.memory_space<any>>) target(%arg17 : memref<256x256xbf16, #tpu.memory_space<vmem>>) target_semaphore(%5 : memref<!tpu.dma_semaphore, #tpu.memory_space<semaphore_mem>>)
    %c3_i32 = arith.constant 3 : i32
    %6 = tpu.memref_slice %arg20[%c3_i32] : memref<5x!tpu.dma_semaphore, #tpu.memory_space<semaphore_mem>> -> memref<1x!tpu.dma_semaphore, #tpu.memory_space<semaphore_mem>>
    %7 = tpu.memref_squeeze %6 : memref<1x!tpu.dma_semaphore, #tpu.memory_space<semaphore_mem>> -> memref<!tpu.dma_semaphore, #tpu.memory_space<semaphore_mem>>
    tpu.enqueue_dma source(%arg10 : memref<256x256xbf16, #tpu.memory_space<any>>) target(%arg18 : memref<256x256xbf16, #tpu.memory_space<vmem>>) target_semaphore(%7 : memref<!tpu.dma_semaphore, #tpu.memory_space<semaphore_mem>>)
    %c4_i32 = arith.constant 4 : i32
    %8 = tpu.memref_slice %arg20[%c4_i32] : memref<5x!tpu.dma_semaphore, #tpu.memory_space<semaphore_mem>> -> memref<1x!tpu.dma_semaphore, #tpu.memory_space<semaphore_mem>>
    %9 = tpu.memref_squeeze %8 : memref<1x!tpu.dma_semaphore, #tpu.memory_space<semaphore_mem>> -> memref<!tpu.dma_semaphore, #tpu.memory_space<semaphore_mem>>
    tpu.enqueue_dma source(%arg12 : memref<256x128xbf16, #tpu.memory_space<any>>) target(%arg19 : memref<256x128xbf16, #tpu.memory_space<vmem>>) target_semaphore(%9 : memref<!tpu.dma_semaphore, #tpu.memory_space<semaphore_mem>>)
    %c0 = arith.constant 0 : index
    %c0_0 = arith.constant 0 : index
    %10 = vector.load %arg1[%c0, %c0_0] : memref<32x8xf32, #tpu.memory_space<vmem>>, vector<32x8xf32>
    %c0_1 = arith.constant 0 : index
    %c0_2 = arith.constant 0 : index
    %11 = vector.load %arg2[%c0_1, %c0_2] : memref<8x256xf32, #tpu.memory_space<vmem>>, vector<8x256xf32>
    %cst = arith.constant dense<0.000000e+00> : vector<32x256xf32>
    %12 = tpu.matmul %10, %11, %cst {dimension_numbers = #tpu.dot_dimension_numbers<[1], [0], [0], [1], [0, 0, 1, 1], [], []>} : vector<32x8xf32>, vector<8x256xf32>, vector<32x256xf32> -> vector<32x256xf32>
    %c0_3 = arith.constant 0 : index
    %c0_4 = arith.constant 0 : index
    %13 = vector.load %arg3[%c0_3, %c0_4] : memref<1x256xf32, #tpu.memory_space<vmem>>, vector<1x256xf32>
    %14 = vector.broadcast %13 : vector<1x256xf32> to vector<32x256xf32>
    %15 = arith.addf %12, %14 : vector<32x256xf32>
    %cst_5 = arith.constant 0.000000e+00 : f32
    %16 = vector.broadcast %cst_5 : f32 to vector<32x256xf32>
    %17 = arith.maximumf %15, %16 : vector<32x256xf32>
    %18 = arith.truncf %17 : vector<32x256xf32> to vector<32x256xbf16>
    %c0_i32_6 = arith.constant 0 : i32
    %19 = tpu.memref_slice %arg20[%c0_i32_6] : memref<5x!tpu.dma_semaphore, #tpu.memory_space<semaphore_mem>> -> memref<1x!tpu.dma_semaphore, #tpu.memory_space<semaphore_mem>>
    %20 = tpu.memref_squeeze %19 : memref<1x!tpu.dma_semaphore, #tpu.memory_space<semaphore_mem>> -> memref<!tpu.dma_semaphore, #tpu.memory_space<semaphore_mem>>
    tpu.wait_dma2 semaphore(%20 : memref<!tpu.dma_semaphore, #tpu.memory_space<semaphore_mem>>) src(%arg4 : memref<256x256xbf16, #tpu.memory_space<any>>) dst(%arg15 : memref<256x256xbf16, #tpu.memory_space<vmem>>)
    %c0_7 = arith.constant 0 : index
    %c0_8 = arith.constant 0 : index
    %21 = vector.load %arg15[%c0_7, %c0_8] : memref<256x256xbf16, #tpu.memory_space<vmem>>, vector<256x256xbf16>
    %cst_9 = arith.constant dense<0.000000e+00> : vector<32x256xf32>
    %22 = tpu.matmul %18, %21, %cst_9 {dimension_numbers = #tpu.dot_dimension_numbers<[1], [0], [0], [1], [0, 0, 1, 1], [], []>} : vector<32x256xbf16>, vector<256x256xbf16>, vector<32x256xf32> -> vector<32x256xf32>
    %c0_10 = arith.constant 0 : index
    %c0_11 = arith.constant 0 : index
    %23 = vector.load %arg5[%c0_10, %c0_11] : memref<1x256xf32, #tpu.memory_space<vmem>>, vector<1x256xf32>
    %24 = vector.broadcast %23 : vector<1x256xf32> to vector<32x256xf32>
    %25 = arith.addf %22, %24 : vector<32x256xf32>
    %cst_12 = arith.constant 0.000000e+00 : f32
    %26 = vector.broadcast %cst_12 : f32 to vector<32x256xf32>
    %27 = arith.maximumf %25, %26 : vector<32x256xf32>
    %28 = arith.truncf %27 : vector<32x256xf32> to vector<32x256xbf16>
    %c1_i32_13 = arith.constant 1 : i32
    %29 = tpu.memref_slice %arg20[%c1_i32_13] : memref<5x!tpu.dma_semaphore, #tpu.memory_space<semaphore_mem>> -> memref<1x!tpu.dma_semaphore, #tpu.memory_space<semaphore_mem>>
    %30 = tpu.memref_squeeze %29 : memref<1x!tpu.dma_semaphore, #tpu.memory_space<semaphore_mem>> -> memref<!tpu.dma_semaphore, #tpu.memory_space<semaphore_mem>>
    tpu.wait_dma2 semaphore(%30 : memref<!tpu.dma_semaphore, #tpu.memory_space<semaphore_mem>>) src(%arg6 : memref<256x256xbf16, #tpu.memory_space<any>>) dst(%arg16 : memref<256x256xbf16, #tpu.memory_space<vmem>>)
    %c0_14 = arith.constant 0 : index
    %c0_15 = arith.constant 0 : index
    %31 = vector.load %arg16[%c0_14, %c0_15] : memref<256x256xbf16, #tpu.memory_space<vmem>>, vector<256x256xbf16>
    %cst_16 = arith.constant dense<0.000000e+00> : vector<32x256xf32>
    %32 = tpu.matmul %28, %31, %cst_16 {dimension_numbers = #tpu.dot_dimension_numbers<[1], [0], [0], [1], [0, 0, 1, 1], [], []>} : vector<32x256xbf16>, vector<256x256xbf16>, vector<32x256xf32> -> vector<32x256xf32>
    %c0_17 = arith.constant 0 : index
    %c0_18 = arith.constant 0 : index
    %33 = vector.load %arg7[%c0_17, %c0_18] : memref<1x256xf32, #tpu.memory_space<vmem>>, vector<1x256xf32>
    %34 = vector.broadcast %33 : vector<1x256xf32> to vector<32x256xf32>
    %35 = arith.addf %32, %34 : vector<32x256xf32>
    %cst_19 = arith.constant 0.000000e+00 : f32
    %36 = vector.broadcast %cst_19 : f32 to vector<32x256xf32>
    %37 = arith.maximumf %35, %36 : vector<32x256xf32>
    %38 = arith.truncf %37 : vector<32x256xf32> to vector<32x256xbf16>
    %c2_i32_20 = arith.constant 2 : i32
    %39 = tpu.memref_slice %arg20[%c2_i32_20] : memref<5x!tpu.dma_semaphore, #tpu.memory_space<semaphore_mem>> -> memref<1x!tpu.dma_semaphore, #tpu.memory_space<semaphore_mem>>
    %40 = tpu.memref_squeeze %39 : memref<1x!tpu.dma_semaphore, #tpu.memory_space<semaphore_mem>> -> memref<!tpu.dma_semaphore, #tpu.memory_space<semaphore_mem>>
    tpu.wait_dma2 semaphore(%40 : memref<!tpu.dma_semaphore, #tpu.memory_space<semaphore_mem>>) src(%arg8 : memref<256x256xbf16, #tpu.memory_space<any>>) dst(%arg17 : memref<256x256xbf16, #tpu.memory_space<vmem>>)
    %c0_21 = arith.constant 0 : index
    %c0_22 = arith.constant 0 : index
    %41 = vector.load %arg17[%c0_21, %c0_22] : memref<256x256xbf16, #tpu.memory_space<vmem>>, vector<256x256xbf16>
    %cst_23 = arith.constant dense<0.000000e+00> : vector<32x256xf32>
    %42 = tpu.matmul %38, %41, %cst_23 {dimension_numbers = #tpu.dot_dimension_numbers<[1], [0], [0], [1], [0, 0, 1, 1], [], []>} : vector<32x256xbf16>, vector<256x256xbf16>, vector<32x256xf32> -> vector<32x256xf32>
    %c0_24 = arith.constant 0 : index
    %c0_25 = arith.constant 0 : index
    %43 = vector.load %arg9[%c0_24, %c0_25] : memref<1x256xf32, #tpu.memory_space<vmem>>, vector<1x256xf32>
    %44 = vector.broadcast %43 : vector<1x256xf32> to vector<32x256xf32>
    %45 = arith.addf %42, %44 : vector<32x256xf32>
    %cst_26 = arith.constant 0.000000e+00 : f32
    %46 = vector.broadcast %cst_26 : f32 to vector<32x256xf32>
    %47 = arith.maximumf %45, %46 : vector<32x256xf32>
    %48 = arith.truncf %47 : vector<32x256xf32> to vector<32x256xbf16>
    %c3_i32_27 = arith.constant 3 : i32
    %49 = tpu.memref_slice %arg20[%c3_i32_27] : memref<5x!tpu.dma_semaphore, #tpu.memory_space<semaphore_mem>> -> memref<1x!tpu.dma_semaphore, #tpu.memory_space<semaphore_mem>>
    %50 = tpu.memref_squeeze %49 : memref<1x!tpu.dma_semaphore, #tpu.memory_space<semaphore_mem>> -> memref<!tpu.dma_semaphore, #tpu.memory_space<semaphore_mem>>
    tpu.wait_dma2 semaphore(%50 : memref<!tpu.dma_semaphore, #tpu.memory_space<semaphore_mem>>) src(%arg10 : memref<256x256xbf16, #tpu.memory_space<any>>) dst(%arg18 : memref<256x256xbf16, #tpu.memory_space<vmem>>)
    %c0_28 = arith.constant 0 : index
    %c0_29 = arith.constant 0 : index
    %51 = vector.load %arg18[%c0_28, %c0_29] : memref<256x256xbf16, #tpu.memory_space<vmem>>, vector<256x256xbf16>
    %cst_30 = arith.constant dense<0.000000e+00> : vector<32x256xf32>
    %52 = tpu.matmul %48, %51, %cst_30 {dimension_numbers = #tpu.dot_dimension_numbers<[1], [0], [0], [1], [0, 0, 1, 1], [], []>} : vector<32x256xbf16>, vector<256x256xbf16>, vector<32x256xf32> -> vector<32x256xf32>
    %c0_31 = arith.constant 0 : index
    %c0_32 = arith.constant 0 : index
    %53 = vector.load %arg11[%c0_31, %c0_32] : memref<1x256xf32, #tpu.memory_space<vmem>>, vector<1x256xf32>
    %54 = vector.broadcast %53 : vector<1x256xf32> to vector<32x256xf32>
    %55 = arith.addf %52, %54 : vector<32x256xf32>
    %cst_33 = arith.constant 0.000000e+00 : f32
    %56 = vector.broadcast %cst_33 : f32 to vector<32x256xf32>
    %57 = arith.maximumf %55, %56 : vector<32x256xf32>
    %58 = arith.truncf %57 : vector<32x256xf32> to vector<32x256xbf16>
    %c4_i32_34 = arith.constant 4 : i32
    %59 = tpu.memref_slice %arg20[%c4_i32_34] : memref<5x!tpu.dma_semaphore, #tpu.memory_space<semaphore_mem>> -> memref<1x!tpu.dma_semaphore, #tpu.memory_space<semaphore_mem>>
    %60 = tpu.memref_squeeze %59 : memref<1x!tpu.dma_semaphore, #tpu.memory_space<semaphore_mem>> -> memref<!tpu.dma_semaphore, #tpu.memory_space<semaphore_mem>>
    tpu.wait_dma2 semaphore(%60 : memref<!tpu.dma_semaphore, #tpu.memory_space<semaphore_mem>>) src(%arg12 : memref<256x128xbf16, #tpu.memory_space<any>>) dst(%arg19 : memref<256x128xbf16, #tpu.memory_space<vmem>>)
    %c0_35 = arith.constant 0 : index
    %c0_36 = arith.constant 0 : index
    %61 = vector.load %arg19[%c0_35, %c0_36] : memref<256x128xbf16, #tpu.memory_space<vmem>>, vector<256x128xbf16>
    %cst_37 = arith.constant dense<0.000000e+00> : vector<32x128xf32>
    %62 = tpu.matmul %58, %61, %cst_37 {dimension_numbers = #tpu.dot_dimension_numbers<[1], [0], [0], [1], [0, 0, 1, 1], [], []>} : vector<32x256xbf16>, vector<256x128xbf16>, vector<32x128xf32> -> vector<32x128xf32>
    %c0_38 = arith.constant 0 : index
    %c0_39 = arith.constant 0 : index
    %63 = vector.load %arg13[%c0_38, %c0_39] : memref<1x128xf32, #tpu.memory_space<vmem>>, vector<1x128xf32>
    %64 = vector.broadcast %63 : vector<1x128xf32> to vector<32x128xf32>
    %65 = arith.addf %62, %64 : vector<32x128xf32>
    %c0_40 = arith.constant 0 : index
    %c0_41 = arith.constant 0 : index
    %66 = vector.load %arg14[%c0_40, %c0_41] : memref<32x128xf32, #tpu.memory_space<vmem>>, vector<32x128xf32>
    tpu.vector_store %arg14[%c0_40, %c0_41], %65 {strides = array<i32>} : memref<32x128xf32, #tpu.memory_space<vmem>>, vector<32x128xf32>,
    return
  }
  func.func @transform_0(%arg0: i32) -> (i32, i32) {
    %c0_i32 = arith.constant 0 : i32
    %c0_i32_0 = arith.constant 0 : i32
    return %arg0, %c0_i32 : i32, i32
  }
  func.func @transform_1(%arg0: i32) -> (i32, i32) {
    %c0_i32 = arith.constant 0 : i32
    %c0_i32_0 = arith.constant 0 : i32
    %c0_i32_1 = arith.constant 0 : i32
    return %c0_i32, %c0_i32_0 : i32, i32
  }
  func.func @transform_2(%arg0: i32) -> (i32, i32) {
    %c0_i32 = arith.constant 0 : i32
    %c0_i32_0 = arith.constant 0 : i32
    %c0_i32_1 = arith.constant 0 : i32
    return %c0_i32, %c0_i32_0 : i32, i32
  }
  func.func @transform_4(%arg0: i32) -> (i32, i32) {
    %c0_i32 = arith.constant 0 : i32
    %c0_i32_0 = arith.constant 0 : i32
    %c0_i32_1 = arith.constant 0 : i32
    return %c0_i32, %c0_i32_0 : i32, i32
  }
  func.func @transform_6(%arg0: i32) -> (i32, i32) {
    %c0_i32 = arith.constant 0 : i32
    %c0_i32_0 = arith.constant 0 : i32
    %c0_i32_1 = arith.constant 0 : i32
    return %c0_i32, %c0_i32_0 : i32, i32
  }
  func.func @transform_8(%arg0: i32) -> (i32, i32) {
    %c0_i32 = arith.constant 0 : i32
    %c0_i32_0 = arith.constant 0 : i32
    %c0_i32_1 = arith.constant 0 : i32
    return %c0_i32, %c0_i32_0 : i32, i32
  }
  func.func @transform_10(%arg0: i32) -> (i32, i32) {
    %c0_i32 = arith.constant 0 : i32
    %c0_i32_0 = arith.constant 0 : i32
    %c0_i32_1 = arith.constant 0 : i32
    return %c0_i32, %c0_i32_0 : i32, i32
  }
  func.func @transform_12(%arg0: i32) -> (i32, i32) {
    %c0_i32 = arith.constant 0 : i32
    %c0_i32_0 = arith.constant 0 : i32
    %c0_i32_1 = arith.constant 0 : i32
    return %c0_i32, %c0_i32_0 : i32, i32
  }
  func.func @transform_13(%arg0: i32) -> (i32, i32) {
    %c0_i32 = arith.constant 0 : i32
    %c0_i32_0 = arith.constant 0 : i32
    return %arg0, %c0_i32 : i32, i32
  }
}

</mosaic_0001>

<llo_original>
// kernel: dqn_forward.1
$region0: #{dqn_forward.1}
  #allocation0 [shape = 'u32[]', space=smem, size = 0x4, offset = 0x4, fixed_abs, tag = 'smem constant byte address 0x4 - core index']
  #allocation1 [shape = 'u32[144,128]{1,0:T(1,128)}', space=vmem, size = 0x12000, scoped, tag = 'internal scratch']
  #allocation2 [shape = 'bf16[256,256]{1,0:T(8,128)(2,1)}', space=vmem, size = 0x20000, scoped, tag = 'scratch operand']
  #allocation3 [shape = 'bf16[256,256]{1,0:T(8,128)(2,1)}', space=vmem, size = 0x20000, scoped, tag = 'scratch operand']
  #allocation4 [shape = 'bf16[256,256]{1,0:T(8,128)(2,1)}', space=vmem, size = 0x20000, scoped, tag = 'scratch operand']
  #allocation5 [shape = 'bf16[256,256]{1,0:T(8,128)(2,1)}', space=vmem, size = 0x20000, scoped, tag = 'scratch operand']
  #allocation6 [shape = 'bf16[256,128]{1,0:T(8,128)(2,1)}', space=vmem, size = 0x10000, scoped, tag = 'scratch operand']
  #allocation7 [shape = 's32[5]{0}', space=sflag, size = 0x14, scoped, tag = 'scratch operand']
  #allocation8 [shape = 's32[]', space=sflag, size = 0x4, offset = 0, fixed_abs, tag = 'sflag constant byte address 0x0 - dummy sync flag']
  #allocation9 [shape = 's32[]', space=sflag, size = 0x4, offset = 0, fixed_abs, tag = 'sflag constant byte address 0x0 - dummy sync flag']
  #allocation10 [shape = 'u32[]', space=smem, size = 0x4, offset = 0x44, fixed_abs, tag = 'smem constant byte address 0x44 - assertion arg 0']
  #allocation11 [shape = 'u32[]', space=smem, size = 0x4, offset = 0x48, fixed_abs, tag = 'smem constant byte address 0x48 - assertion arg 1']
  #allocation12 [shape = 's32[]', space=sflag, size = 0x4, offset = 0, fixed_abs, tag = 'sflag constant byte address 0x0 - dummy sync flag']
  #allocation13 [shape = 's32[]', space=sflag, size = 0x4, offset = 0, fixed_abs, tag = 'sflag constant byte address 0x0 - dummy sync flag']
  #allocation14 [shape = 's32[]', space=sflag, size = 0x4, offset = 0, fixed_abs, tag = 'sflag constant byte address 0x0 - dummy sync flag']
  #allocation15 [shape = 's32[]', space=sflag, size = 0x4, offset = 0, fixed_abs, tag = 'sflag constant byte address 0x0 - dummy sync flag']
  #allocation16 [shape = 's32[]', space=sflag, size = 0x4, offset = 0, fixed_abs, tag = 'sflag constant byte address 0x0 - dummy sync flag']
  #allocation17 [shape = 's32[]', space=sflag, size = 0x4, offset = 0, fixed_abs, tag = 'sflag constant byte address 0x0 - dummy sync flag']
  #allocation18 [shape = 's32[]', space=sflag, size = 0x4, offset = 0, fixed_abs, tag = 'sflag constant byte address 0x0 - dummy sync flag']
  #allocation19 [shape = 's32[]', space=sflag, size = 0x4, offset = 0, fixed_abs, tag = 'sflag constant byte address 0x0 - dummy sync flag']
  %s0 = inlined_call_operand.vmem [shape: f32[32,8], index: 0, kind: input, shape index: {}]
  %s1 = inlined_call_operand.vmem [shape: f32[8,256], index: 1, kind: input, shape index: {}]
  %s2 = inlined_call_operand.vmem [shape: f32[1,256], index: 2, kind: input, shape index: {}]
  %s3 = inlined_call_operand.hbm [shape: bf16[256,256], index: 3, kind: input, shape index: {}]
  %s4 = inlined_call_operand.vmem [shape: f32[1,256], index: 4, kind: input, shape index: {}]
  %s5 = inlined_call_operand.hbm [shape: bf16[256,256], index: 5, kind: input, shape index: {}]
  %s6 = inlined_call_operand.vmem [shape: f32[1,256], index: 6, kind: input, shape index: {}]
  %s7 = inlined_call_operand.hbm [shape: bf16[256,256], index: 7, kind: input, shape index: {}]
  %s8 = inlined_call_operand.vmem [shape: f32[1,256], index: 8, kind: input, shape index: {}]
  %s9 = inlined_call_operand.hbm [shape: bf16[256,256], index: 9, kind: input, shape index: {}]
  %s10 = inlined_call_operand.vmem [shape: f32[1,256], index: 10, kind: input, shape index: {}]
  %s11 = inlined_call_operand.hbm [shape: bf16[256,128], index: 11, kind: input, shape index: {}]
  %s12 = inlined_call_operand.vmem [shape: f32[1,128], index: 12, kind: input, shape index: {}]
  %s13 = inlined_call_operand.vmem [shape: f32[32,128], index: 13, kind: output, shape index: {}]
  %s14 = sld [smem:[#allocation0]]
  $region62: #{dqn_forward.1} parent=0
    _
  %s16 = ssub.s32 1, %s14
  %s17 = scalar_select 0, %s16, %s14
  // Predicated region
  $region2: #{dqn_forward.1} parent=0 // pred_check
    _
  $region3: #{dqn_forward.1} parent=0 // pred_check_branch
    %19 = sbr.rel (0) target = $region5
  $region4: #{dqn_forward.1} parent=0 // pred_region
    _
  $region5: #{dqn_forward.1} parent=0 // pred_fallthru
    _
  // Predicated region
  $region6: #{dqn_forward.1} parent=0 // pred_check
    _
  $region7: #{dqn_forward.1} parent=0 // pred_check_branch
    %21 = sbr.rel (0) target = $region9
  $region8: #{dqn_forward.1} parent=0 // pred_region
    _
  $region9: #{dqn_forward.1} parent=0 // pred_fallthru
    _
  // Predicated region
  $region10: #{dqn_forward.1} parent=0 // pred_check
    _
  $region11: #{dqn_forward.1} parent=0 // pred_check_branch
    %23 = sbr.rel (0) target = $region13
  $region12: #{dqn_forward.1} parent=0 // pred_region
    _
  $region13: #{dqn_forward.1} parent=0 // pred_fallthru
    _
  // Predicated region
  $region14: #{dqn_forward.1} parent=0 // pred_check
    _
  $region15: #{dqn_forward.1} parent=0 // pred_check_branch
    %25 = sbr.rel (0) target = $region17
  $region16: #{dqn_forward.1} parent=0 // pred_region
    _
  $region17: #{dqn_forward.1} parent=0 // pred_fallthru
    _
  // Predicated region
  $region18: #{dqn_forward.1} parent=0 // pred_check
    _
  $region19: #{dqn_forward.1} parent=0 // pred_check_branch
    %27 = sbr.rel (0) target = $region21
  $region20: #{dqn_forward.1} parent=0 // pred_region
    _
  $region21: #{dqn_forward.1} parent=0 // pred_fallthru
    _
  // Predicated region
  $region22: #{dqn_forward.1} parent=0 // pred_check
    _
  $region23: #{dqn_forward.1} parent=0 // pred_check_branch
    %29 = sbr.rel (0) target = $region25
  $region24: #{dqn_forward.1} parent=0 // pred_region
    _
  $region25: #{dqn_forward.1} parent=0 // pred_fallthru
    _
  // Predicated region
  $region26: #{dqn_forward.1} parent=0 // pred_check
    _
  $region27: #{dqn_forward.1} parent=0 // pred_check_branch
    %31 = sbr.rel (0) target = $region29
  $region28: #{dqn_forward.1} parent=0 // pred_region
    _
  $region29: #{dqn_forward.1} parent=0 // pred_fallthru
    _
  // Predicated region
  $region30: #{dqn_forward.1} parent=0 // pred_check
    _
  $region31: #{dqn_forward.1} parent=0 // pred_check_branch
    %33 = sbr.rel (0) target = $region33
  $region32: #{dqn_forward.1} parent=0 // pred_region
    _
  $region33: #{dqn_forward.1} parent=0 // pred_fallthru
    _
  // Predicated region
  $region34: #{dqn_forward.1} parent=0 // pred_check
    _
  $region35: #{dqn_forward.1} parent=0 // pred_check_branch
    %36 = sbr.rel target = $region37
  $region36: #{dqn_forward.1} parent=0 // pred_region
    %37 = sst [smem:[#allocation10]] [#allocation9]
    %38 = sst [smem:[#allocation11]] [#allocation8]
  $region37: #{dqn_forward.1} parent=0 // pred_fallthru
    _
  %40 = shalt.err (0)
  %s42 = sshll.u32 [#allocation2], 4
  %s43 = int_to_ptr.vmem [resolvable:$true] %s42
  %45 = dma.hbm_to_vmem [thread:$0]  %s3, 4096, %s43, [#allocation7]
  %s46 = scalar_lea.sflag [#allocation7], 1
  // Predicated region
  $region38: #{dqn_forward.1} parent=0 // pred_check
    _
  $region39: #{dqn_forward.1} parent=0 // pred_check_branch
    %48 = sbr.rel target = $region41
  $region40: #{dqn_forward.1} parent=0 // pred_region
    %49 = sst [smem:[#allocation10]] [#allocation13]
    %50 = sst [smem:[#allocation11]] [#allocation12]
  $region41: #{dqn_forward.1} parent=0 // pred_fallthru
    _
  %52 = shalt.err (0)
  %s54 = sshll.u32 [#allocation3], 4
  %s55 = int_to_ptr.vmem [resolvable:$true] %s54
  %57 = dma.hbm_to_vmem [thread:$0]  %s5, 4096, %s55, %s46
  %s58 = scalar_lea.sflag [#allocation7], 2
  // Predicated region
  $region42: #{dqn_forward.1} parent=0 // pred_check
    _
  $region43: #{dqn_forward.1} parent=0 // pred_check_branch
    %60 = sbr.rel target = $region45
  $region44: #{dqn_forward.1} parent=0 // pred_region
    %61 = sst [smem:[#allocation10]] [#allocation15]
    %62 = sst [smem:[#allocation11]] [#allocation14]
  $region45: #{dqn_forward.1} parent=0 // pred_fallthru
    _
  %64 = shalt.err (0)
  %s66 = sshll.u32 [#allocation4], 4
  %s67 = int_to_ptr.vmem [resolvable:$true] %s66
  %69 = dma.hbm_to_vmem [thread:$0]  %s7, 4096, %s67, %s58
  %s70 = scalar_lea.sflag [#allocation7], 3
  // Predicated region
  $region46: #{dqn_forward.1} parent=0 // pred_check
    _
  $region47: #{dqn_forward.1} parent=0 // pred_check_branch
    %72 = sbr.rel target = $region49
  $region48: #{dqn_forward.1} parent=0 // pred_region
    %73 = sst [smem:[#allocation10]] [#allocation17]
    %74 = sst [smem:[#allocation11]] [#allocation16]
  $region49: #{dqn_forward.1} parent=0 // pred_fallthru
    _
  %76 = shalt.err (0)
  %s78 = sshll.u32 [#allocation5], 4
  %s79 = int_to_ptr.vmem [resolvable:$true] %s78
  %81 = dma.hbm_to_vmem [thread:$0]  %s9, 4096, %s79, %s70
  %s82 = scalar_lea.sflag [#allocation7], 4
  // Predicated region
  $region50: #{dqn_forward.1} parent=0 // pred_check
    _
  $region51: #{dqn_forward.1} parent=0 // pred_check_branch
    %84 = sbr.rel target = $region53
  $region52: #{dqn_forward.1} parent=0 // pred_region
    %85 = sst [smem:[#allocation10]] [#allocation19]
    %86 = sst [smem:[#allocation11]] [#allocation18]
  $region53: #{dqn_forward.1} parent=0 // pred_fallthru
    _
  %88 = shalt.err (0)
  %s90 = sshll.u32 [#allocation6], 4
  %s91 = int_to_ptr.vmem [resolvable:$true] %s90
  %93 = dma.hbm_to_vmem [thread:$0]  %s11, 2048, %s91, %s82
  %v94 = vld [vmem:[%s0] sm:$0xff]
  %v95 = vld [vmem:[%s0 + $0x8] sm:$0xff]
  %v96 = vld [vmem:[%s0 + $0x10] sm:$0xff]
  %v97 = vld [vmem:[%s0 + $0x18] sm:$0xff]
  %v98 = vld [vmem:[%s1] sm:$0xff]
  %v99 = vld [vmem:[%s1 + $0x8] sm:$0xff]
  %v100 = vld [vmem:[%s2] sm:$0x3]
  %v102 = vlaneseq
  %v103 = vshrl.u32 %v102, 7
  %v104 = vsub.s32 0, %v103
  %v105 = vrot.slane %v100, %v104
  %v106 = vlaneseq
  %v107 = vshrl.u32 %v106, 7
  %v108 = vsub.s32 1, %v107
  %v109 = vrot.slane %v100, %v108
  %vm112 = vcmask 64512
  %v114 = vsel %vm112, %v94, 0
  %v117 = vsel %vm112, %v95, 0
  %v120 = vsel %vm112, %v96, 0
  %v123 = vsel %vm112, %v97, 0
  %125 = vmatprep.subr.mxu0 0.0
  %126 = vmatpush1.msra.mxu0 0.0
  %127 = vmatprep.subr.mxu0 0.0
  %128 = vmatpush1.msra.mxu0 0.0
  %129 = vmatprep.subr.mxu0 0.0
  %130 = vmatpush1.msra.mxu0 0.0
  %131 = vmatprep.subr.mxu0 0.0
  %132 = vmatpush1.msra.mxu0 0.0
  %133 = vmatprep.subr.mxu0 0.0
  %134 = vmatpush1.msra.mxu0 0.0
  %135 = vmatprep.subr.mxu0 0.0
  %136 = vmatpush1.msra.mxu0 0.0
  %137 = vmatprep.subr.mxu0 0.0
  %138 = vmatpush1.msra.mxu0 0.0
  %139 = vmatprep.subr.mxu0 0.0
  %140 = vmatpush1.msra.mxu0 0.0
  %141 = vmatprep.subr.mxu0 0.0
  %142 = vmatpush1.msra.mxu0 0.0
  %143 = vmatprep.subr.mxu0 0.0
  %144 = vmatpush1.msra.mxu0 0.0
  %145 = vmatprep.subr.mxu0 0.0
  %146 = vmatpush1.msra.mxu0 0.0
  %147 = vmatprep.subr.mxu0 0.0
  %148 = vmatpush1.msra.mxu0 0.0
  %149 = vmatprep.subr.mxu0 0.0
  %150 = vmatpush1.msra.mxu0 0.0
  %151 = vmatprep.subr.mxu0 0.0
  %152 = vmatpush1.msra.mxu0 0.0
  %153 = vmatprep.subr.mxu0 0.0
  %154 = vmatpush1.msra.mxu0 0.0
  %155 = vmatprep.subr.mxu0 %v99
  %156 = vmatpush1.msra.mxu0 %v98
  %157 = vmatprep.subr.mxu0 0.0
  %158 = vmatpush2.msra.mxu0 0.0
  %159 = vmatprep.subr.mxu0 0.0
  %160 = vmatpush2.msra.mxu0 0.0
  %161 = vmatprep.subr.mxu0 0.0
  %162 = vmatpush2.msra.mxu0 0.0
  %163 = vmatprep.subr.mxu0 0.0
  %164 = vmatpush2.msra.mxu0 0.0
  %165 = vmatprep.subr.mxu0 0.0
  %166 = vmatpush2.msra.mxu0 0.0
  %167 = vmatprep.subr.mxu0 0.0
  %168 = vmatpush2.msra.mxu0 0.0
  %169 = vmatprep.subr.mxu0 0.0
  %170 = vmatpush2.msra.mxu0 0.0
  %171 = vmatprep.subr.mxu0 0.0
  %172 = vmatpush2.msra.mxu0 0.0
  %173 = vmatprep.subr.mxu0 0.0
  %174 = vmatpush2.msra.mxu0 0.0
  %175 = vmatprep.subr.mxu0 0.0
  %176 = vmatpush2.msra.mxu0 0.0
  %177 = vmatprep.subr.mxu0 0.0
  %178 = vmatpush2.msra.mxu0 0.0
  %179 = vmatprep.subr.mxu0 0.0
  %180 = vmatpush2.msra.mxu0 0.0
  %181 = vmatprep.subr.mxu0 0.0
  %182 = vmatpush2.msra.mxu0 0.0
  %183 = vmatprep.subr.mxu0 0.0
  %184 = vmatpush2.msra.mxu0 0.0
  %185 = vmatprep.subr.mxu0 0.0
  %186 = vmatpush2.msra.mxu0 0.0
  %187 = vmatprep.subr.mxu0 0.0
  %188 = vmatpush2.msra.mxu0 0.0
  %189 = vmatprep.mubr.f32.mxu0 0.0
  %190 = vmatmul.mubr.f32.gmra.mxu0 %v114
  %v191 = vpop.f32.mrf.mxu0
  %v192 = vadd.f32 %v105, %v191
  %v193 = vpop.f32.mrf.mxu0
  %v194 = vadd.f32 %v109, %v193
  %195 = vmatprep.mubr.f32.mxu0 0.0
  %196 = vmatmul.mubr.f32.gmra.mxu0 %v117
  %v197 = vpop.f32.mrf.mxu0
  %v198 = vadd.f32 %v105, %v197
  %v199 = vpop.f32.mrf.mxu0
  %v200 = vadd.f32 %v109, %v199
  %201 = vmatprep.mubr.f32.mxu0 0.0
  %202 = vmatmul.mubr.f32.gmra.mxu0 %v120
  %v203 = vpop.f32.mrf.mxu0
  %v204 = vadd.f32 %v105, %v203
  %v205 = vpop.f32.mrf.mxu0
  %v206 = vadd.f32 %v109, %v205
  %207 = vmatprep.mubr.f32.mxu0 0.0
  %208 = vmatmul.mubr.f32.gmra.mxu0 %v123
  %v209 = vpop.f32.mrf.mxu0
  %v210 = vadd.f32 %v105, %v209
  %v211 = vpop.f32.mrf.mxu0
  %v212 = vadd.f32 %v109, %v211
  %213 = vdwg.mxu0
  %v214 = vmax.f32 %v192, 0.0
  %v215 = vmax.f32 %v194, 0.0
  %v216 = vmax.f32 %v198, 0.0
  %v217 = vmax.f32 %v200, 0.0
  %v218 = vmax.f32 %v204, 0.0
  %v219 = vmax.f32 %v206, 0.0
  %v220 = vmax.f32 %v210, 0.0
  %v221 = vmax.f32 %v212, 0.0
  %v222 = vpack.c.bf16 %v216, %v214
  %v223 = vpack.c.bf16 %v217, %v215
  %v224 = vpack.c.bf16 %v220, %v218
  %v225 = vpack.c.bf16 %v221, %v219
  %s226 = smul.u32 4, 32
  %s227 = smul.u32 %s226, 2
  %s228 = sshll.u32 %s227, 4
  %229 = dma.done [#allocation7], %s228
  %v230 = vld [vmem:[#allocation2] sm:$0xff]
  %v231 = vld [vmem:[#allocation2 + $0x8] sm:$0xff]
  %v232 = vld [vmem:[#allocation2 + $0x10] sm:$0xff]
  %v233 = vld [vmem:[#allocation2 + $0x18] sm:$0xff]
  %v234 = vld [vmem:[#allocation2 + $0x20] sm:$0xff]
  %v235 = vld [vmem:[#allocation2 + $0x28] sm:$0xff]
  %v236 = vld [vmem:[#allocation2 + $0x30] sm:$0xff]
  %v237 = vld [vmem:[#allocation2 + $0x38] sm:$0xff]
  %v238 = vld [vmem:[#allocation2 + $0x40] sm:$0xff]
  %v239 = vld [vmem:[#allocation2 + $0x48] sm:$0xff]
  %v240 = vld [vmem:[#allocation2 + $0x50] sm:$0xff]
  %v241 = vld [vmem:[#allocation2 + $0x58] sm:$0xff]
  %v242 = vld [vmem:[#allocation2 + $0x60] sm:$0xff]
  %v243 = vld [vmem:[#allocation2 + $0x68] sm:$0xff]
  %v244 = vld [vmem:[#allocation2 + $0x70] sm:$0xff]
  %v245 = vld [vmem:[#allocation2 + $0x78] sm:$0xff]
  %v246 = vld [vmem:[#allocation2 + $0x80] sm:$0xff]
  %v247 = vld [vmem:[#allocation2 + $0x88] sm:$0xff]
  %v248 = vld [vmem:[#allocation2 + $0x90] sm:$0xff]
  %v249 = vld [vmem:[#allocation2 + $0x98] sm:$0xff]
  %v250 = vld [vmem:[#allocation2 + $0xa0] sm:$0xff]
  %v251 = vld [vmem:[#allocation2 + $0xa8] sm:$0xff]
  %v252 = vld [vmem:[#allocation2 + $0xb0] sm:$0xff]
  %v253 = vld [vmem:[#allocation2 + $0xb8] sm:$0xff]
  %v254 = vld [vmem:[#allocation2 + $0xc0] sm:$0xff]
  %v255 = vld [vmem:[#allocation2 + $0xc8] sm:$0xff]
  %v256 = vld [vmem:[#allocation2 + $0xd0] sm:$0xff]
  %v257 = vld [vmem:[#allocation2 + $0xd8] sm:$0xff]
  %v258 = vld [vmem:[#allocation2 + $0xe0] sm:$0xff]
  %v259 = vld [vmem:[#allocation2 + $0xe8] sm:$0xff]
  %v260 = vld [vmem:[#allocation2 + $0xf0] sm:$0xff]
  %v261 = vld [vmem:[#allocation2 + $0xf8] sm:$0xff]
  %v262 = vld [vmem:[%s4] sm:$0x3]
  %v264 = vlaneseq
  %v265 = vshrl.u32 %v264, 7
  %v266 = vsub.s32 0, %v265
  %v267 = vrot.slane %v262, %v266
  %v268 = vlaneseq
  %v269 = vshrl.u32 %v268, 7
  %v270 = vsub.s32 1, %v269
  %v271 = vrot.slane %v262, %v270
  %v306 = vunpack.c.l.b16 %v230
  %v307 = vunpack.c.h.b16 %v230
  %v308 = vunpack.c.l.b16 %v231
  %v309 = vunpack.c.h.b16 %v231
  %v310 = vunpack.c.l.b16 %v232
  %v311 = vunpack.c.h.b16 %v232
  %v312 = vunpack.c.l.b16 %v233
  %v313 = vunpack.c.h.b16 %v233
  %v314 = vunpack.c.l.b16 %v234
  %v315 = vunpack.c.h.b16 %v234
  %v316 = vunpack.c.l.b16 %v235
  %v317 = vunpack.c.h.b16 %v235
  %v318 = vunpack.c.l.b16 %v236
  %v319 = vunpack.c.h.b16 %v236
  %v320 = vunpack.c.l.b16 %v237
  %v321 = vunpack.c.h.b16 %v237
  %v322 = vunpack.c.l.b16 %v238
  %v323 = vunpack.c.h.b16 %v238
  %v324 = vunpack.c.l.b16 %v239
  %v325 = vunpack.c.h.b16 %v239
  %v326 = vunpack.c.l.b16 %v240
  %v327 = vunpack.c.h.b16 %v240
  %v328 = vunpack.c.l.b16 %v241
  %v329 = vunpack.c.h.b16 %v241
  %v330 = vunpack.c.l.b16 %v242
  %v331 = vunpack.c.h.b16 %v242
  %v332 = vunpack.c.l.b16 %v243
  %v333 = vunpack.c.h.b16 %v243
  %v334 = vunpack.c.l.b16 %v244
  %v335 = vunpack.c.h.b16 %v244
  %v336 = vunpack.c.l.b16 %v245
  %v337 = vunpack.c.h.b16 %v245
  %v338 = vunpack.c.l.b16 %v246
  %v339 = vunpack.c.h.b16 %v246
  %v340 = vunpack.c.l.b16 %v247
  %v341 = vunpack.c.h.b16 %v247
  %v342 = vunpack.c.l.b16 %v248
  %v343 = vunpack.c.h.b16 %v248
  %v344 = vunpack.c.l.b16 %v249
  %v345 = vunpack.c.h.b16 %v249
  %v346 = vunpack.c.l.b16 %v250
  %v347 = vunpack.c.h.b16 %v250
  %v348 = vunpack.c.l.b16 %v251
  %v349 = vunpack.c.h.b16 %v251
  %v350 = vunpack.c.l.b16 %v252
  %v351 = vunpack.c.h.b16 %v252
  %v352 = vunpack.c.l.b16 %v253
  %v353 = vunpack.c.h.b16 %v253
  %v354 = vunpack.c.l.b16 %v254
  %v355 = vunpack.c.h.b16 %v254
  %v356 = vunpack.c.l.b16 %v255
  %v357 = vunpack.c.h.b16 %v255
  %v358 = vunpack.c.l.b16 %v256
  %v359 = vunpack.c.h.b16 %v256
  %v360 = vunpack.c.l.b16 %v257
  %v361 = vunpack.c.h.b16 %v257
  %v362 = vunpack.c.l.b16 %v258
  %v363 = vunpack.c.h.b16 %v258
  %v364 = vunpack.c.l.b16 %v259
  %v365 = vunpack.c.h.b16 %v259
  %v366 = vunpack.c.l.b16 %v260
  %v367 = vunpack.c.h.b16 %v260
  %v368 = vunpack.c.l.b16 %v261
  %v369 = vunpack.c.h.b16 %v261
  %v370 = vpack.c.b16 %v308, %v306
  %v371 = vpack.c.b16 %v309, %v307
  %v372 = vpack.c.b16 %v312, %v310
  %v373 = vpack.c.b16 %v313, %v311
  %v374 = vpack.c.b16 %v316, %v314
  %v375 = vpack.c.b16 %v317, %v315
  %v376 = vpack.c.b16 %v320, %v318
  %v377 = vpack.c.b16 %v321, %v319
  %v378 = vpack.c.b16 %v324, %v322
  %v379 = vpack.c.b16 %v325, %v323
  %v380 = vpack.c.b16 %v328, %v326
  %v381 = vpack.c.b16 %v329, %v327
  %v382 = vpack.c.b16 %v332, %v330
  %v383 = vpack.c.b16 %v333, %v331
  %v384 = vpack.c.b16 %v336, %v334
  %v385 = vpack.c.b16 %v337, %v335
  %v386 = vpack.c.b16 %v340, %v338
  %v387 = vpack.c.b16 %v341, %v339
  %v388 = vpack.c.b16 %v344, %v342
  %v389 = vpack.c.b16 %v345, %v343
  %v390 = vpack.c.b16 %v348, %v346
  %v391 = vpack.c.b16 %v349, %v347
  %v392 = vpack.c.b16 %v352, %v350
  %v393 = vpack.c.b16 %v353, %v351
  %v394 = vpack.c.b16 %v356, %v354
  %v395 = vpack.c.b16 %v357, %v355
  %v396 = vpack.c.b16 %v360, %v358
  %v397 = vpack.c.b16 %v361, %v359
  %v398 = vpack.c.b16 %v364, %v362
  %v399 = vpack.c.b16 %v365, %v363
  %v400 = vpack.c.b16 %v368, %v366
  %v401 = vpack.c.b16 %v369, %v367
  %434 = vmatprep.subr.bf16.mxu0 %v385
  %435 = vmatpush1.bf16.msra.mxu0 %v384
  %436 = vmatprep.subr.bf16.mxu0 %v383
  %437 = vmatpush1.bf16.msra.mxu0 %v382
  %438 = vmatprep.subr.bf16.mxu0 %v381
  %439 = vmatpush1.bf16.msra.mxu0 %v380
  %440 = vmatprep.subr.bf16.mxu0 %v379
  %441 = vmatpush1.bf16.msra.mxu0 %v378
  %442 = vmatprep.subr.bf16.mxu0 %v377
  %443 = vmatpush1.bf16.msra.mxu0 %v376
  %444 = vmatprep.subr.bf16.mxu0 %v375
  %445 = vmatpush1.bf16.msra.mxu0 %v374
  %446 = vmatprep.subr.bf16.mxu0 %v373
  %447 = vmatpush1.bf16.msra.mxu0 %v372
  %448 = vmatprep.subr.bf16.mxu0 %v371
  %449 = vmatpush1.bf16.msra.mxu0 %v370
  %450 = vmatprep.subr.bf16.mxu0 %v401
  %451 = vmatpush2.bf16.msra.mxu0 %v400
  %452 = vmatprep.subr.bf16.mxu0 %v399
  %453 = vmatpush2.bf16.msra.mxu0 %v398
  %454 = vmatprep.subr.bf16.mxu0 %v397
  %455 = vmatpush2.bf16.msra.mxu0 %v396
  %456 = vmatprep.subr.bf16.mxu0 %v395
  %457 = vmatpush2.bf16.msra.mxu0 %v394
  %458 = vmatprep.subr.bf16.mxu0 %v393
  %459 = vmatpush2.bf16.msra.mxu0 %v392
  %460 = vmatprep.subr.bf16.mxu0 %v391
  %461 = vmatpush2.bf16.msra.mxu0 %v390
  %462 = vmatprep.subr.bf16.mxu0 %v389
  %463 = vmatpush2.bf16.msra.mxu0 %v388
  %464 = vmatprep.subr.bf16.mxu0 %v387
  %465 = vmatpush2.bf16.msra.mxu0 %v386
  %466 = vmatprep.mubr.bf16.mxu0 %v223
  %467 = vmatmul.mubr.bf16.gmra.mxu0 %v222
  %v468 = vpop.f32.mrf.mxu0
  %v469 = vadd.f32 %v267, %v468
  %v470 = vpop.f32.mrf.mxu0
  %v471 = vadd.f32 %v271, %v470
  %v472 = vpop.f32.mrf.mxu0
  %v473 = vadd.f32 %v267, %v472
  %v474 = vpop.f32.mrf.mxu0
  %v475 = vadd.f32 %v271, %v474
  %476 = vmatprep.mubr.bf16.mxu0 %v225
  %477 = vmatmul.mubr.bf16.gmra.mxu0 %v224
  %v478 = vpop.f32.mrf.mxu0
  %v479 = vadd.f32 %v267, %v478
  %v480 = vpop.f32.mrf.mxu0
  %v481 = vadd.f32 %v271, %v480
  %v482 = vpop.f32.mrf.mxu0
  %v483 = vadd.f32 %v267, %v482
  %v484 = vpop.f32.mrf.mxu0
  %v485 = vadd.f32 %v271, %v484
  %486 = vdwg.mxu0
  %v487 = vmax.f32 %v469, 0.0
  %v488 = vmax.f32 %v471, 0.0
  %v489 = vmax.f32 %v473, 0.0
  %v490 = vmax.f32 %v475, 0.0
  %v491 = vmax.f32 %v479, 0.0
  %v492 = vmax.f32 %v481, 0.0
  %v493 = vmax.f32 %v483, 0.0
  %v494 = vmax.f32 %v485, 0.0
  %v495 = vpack.c.bf16 %v489, %v487
  %v496 = vpack.c.bf16 %v490, %v488
  %v497 = vpack.c.bf16 %v493, %v491
  %v498 = vpack.c.bf16 %v494, %v492
  %s499 = sshll.u32 %s227, 4
  %500 = dma.done %s46, %s499
  %v501 = vld [vmem:[#allocation3] sm:$0xff]
  %v502 = vld [vmem:[#allocation3 + $0x8] sm:$0xff]
  %v503 = vld [vmem:[#allocation3 + $0x10] sm:$0xff]
  %v504 = vld [vmem:[#allocation3 + $0x18] sm:$0xff]
  %v505 = vld [vmem:[#allocation3 + $0x20] sm:$0xff]
  %v506 = vld [vmem:[#allocation3 + $0x28] sm:$0xff]
  %v507 = vld [vmem:[#allocation3 + $0x30] sm:$0xff]
  %v508 = vld [vmem:[#allocation3 + $0x38] sm:$0xff]
  %v509 = vld [vmem:[#allocation3 + $0x40] sm:$0xff]
  %v510 = vld [vmem:[#allocation3 + $0x48] sm:$0xff]
  %v511 = vld [vmem:[#allocation3 + $0x50] sm:$0xff]
  %v512 = vld [vmem:[#allocation3 + $0x58] sm:$0xff]
  %v513 = vld [vmem:[#allocation3 + $0x60] sm:$0xff]
  %v514 = vld [vmem:[#allocation3 + $0x68] sm:$0xff]
  %v515 = vld [vmem:[#allocation3 + $0x70] sm:$0xff]
  %v516 = vld [vmem:[#allocation3 + $0x78] sm:$0xff]
  %v517 = vld [vmem:[#allocation3 + $0x80] sm:$0xff]
  %v518 = vld [vmem:[#allocation3 + $0x88] sm:$0xff]
  %v519 = vld [vmem:[#allocation3 + $0x90] sm:$0xff]
  %v520 = vld [vmem:[#allocation3 + $0x98] sm:$0xff]
  %v521 = vld [vmem:[#allocation3 + $0xa0] sm:$0xff]
  %v522 = vld [vmem:[#allocation3 + $0xa8] sm:$0xff]
  %v523 = vld [vmem:[#allocation3 + $0xb0] sm:$0xff]
  %v524 = vld [vmem:[#allocation3 + $0xb8] sm:$0xff]
  %v525 = vld [vmem:[#allocation3 + $0xc0] sm:$0xff]
  %v526 = vld [vmem:[#allocation3 + $0xc8] sm:$0xff]
  %v527 = vld [vmem:[#allocation3 + $0xd0] sm:$0xff]
  %v528 = vld [vmem:[#allocation3 + $0xd8] sm:$0xff]
  %v529 = vld [vmem:[#allocation3 + $0xe0] sm:$0xff]
  %v530 = vld [vmem:[#allocation3 + $0xe8] sm:$0xff]
  %v531 = vld [vmem:[#allocation3 + $0xf0] sm:$0xff]
  %v532 = vld [vmem:[#allocation3 + $0xf8] sm:$0xff]
  %v533 = vld [vmem:[%s6] sm:$0x3]
  %v535 = vlaneseq
  %v536 = vshrl.u32 %v535, 7
  %v537 = vsub.s32 0, %v536
  %v538 = vrot.slane %v533, %v537
  %v539 = vlaneseq
  %v540 = vshrl.u32 %v539, 7
  %v541 = vsub.s32 1, %v540
  %v542 = vrot.slane %v533, %v541
  %v577 = vunpack.c.l.b16 %v501
  %v578 = vunpack.c.h.b16 %v501
  %v579 = vunpack.c.l.b16 %v502
  %v580 = vunpack.c.h.b16 %v502
  %v581 = vunpack.c.l.b16 %v503
  %v582 = vunpack.c.h.b16 %v503
  %v583 = vunpack.c.l.b16 %v504
  %v584 = vunpack.c.h.b16 %v504
  %v585 = vunpack.c.l.b16 %v505
  %v586 = vunpack.c.h.b16 %v505
  %v587 = vunpack.c.l.b16 %v506
  %v588 = vunpack.c.h.b16 %v506
  %v589 = vunpack.c.l.b16 %v507
  %v590 = vunpack.c.h.b16 %v507
  %v591 = vunpack.c.l.b16 %v508
  %v592 = vunpack.c.h.b16 %v508
  %v593 = vunpack.c.l.b16 %v509
  %v594 = vunpack.c.h.b16 %v509
  %v595 = vunpack.c.l.b16 %v510
  %v596 = vunpack.c.h.b16 %v510
  %v597 = vunpack.c.l.b16 %v511
  %v598 = vunpack.c.h.b16 %v511
  %v599 = vunpack.c.l.b16 %v512
  %v600 = vunpack.c.h.b16 %v512
  %v601 = vunpack.c.l.b16 %v513
  %v602 = vunpack.c.h.b16 %v513
  %v603 = vunpack.c.l.b16 %v514
  %v604 = vunpack.c.h.b16 %v514
  %v605 = vunpack.c.l.b16 %v515
  %v606 = vunpack.c.h.b16 %v515
  %v607 = vunpack.c.l.b16 %v516
  %v608 = vunpack.c.h.b16 %v516
  %v609 = vunpack.c.l.b16 %v517
  %v610 = vunpack.c.h.b16 %v517
  %v611 = vunpack.c.l.b16 %v518
  %v612 = vunpack.c.h.b16 %v518
  %v613 = vunpack.c.l.b16 %v519
  %v614 = vunpack.c.h.b16 %v519
  %v615 = vunpack.c.l.b16 %v520
  %v616 = vunpack.c.h.b16 %v520
  %v617 = vunpack.c.l.b16 %v521
  %v618 = vunpack.c.h.b16 %v521
  %v619 = vunpack.c.l.b16 %v522
  %v620 = vunpack.c.h.b16 %v522
  %v621 = vunpack.c.l.b16 %v523
  %v622 = vunpack.c.h.b16 %v523
  %v623 = vunpack.c.l.b16 %v524
  %v624 = vunpack.c.h.b16 %v524
  %v625 = vunpack.c.l.b16 %v525
  %v626 = vunpack.c.h.b16 %v525
  %v627 = vunpack.c.l.b16 %v526
  %v628 = vunpack.c.h.b16 %v526
  %v629 = vunpack.c.l.b16 %v527
  %v630 = vunpack.c.h.b16 %v527
  %v631 = vunpack.c.l.b16 %v528
  %v632 = vunpack.c.h.b16 %v528
  %v633 = vunpack.c.l.b16 %v529
  %v634 = vunpack.c.h.b16 %v529
  %v635 = vunpack.c.l.b16 %v530
  %v636 = vunpack.c.h.b16 %v530
  %v637 = vunpack.c.l.b16 %v531
  %v638 = vunpack.c.h.b16 %v531
  %v639 = vunpack.c.l.b16 %v532
  %v640 = vunpack.c.h.b16 %v532
  %v641 = vpack.c.b16 %v579, %v577
  %v642 = vpack.c.b16 %v580, %v578
  %v643 = vpack.c.b16 %v583, %v581
  %v644 = vpack.c.b16 %v584, %v582
  %v645 = vpack.c.b16 %v587, %v585
  %v646 = vpack.c.b16 %v588, %v586
  %v647 = vpack.c.b16 %v591, %v589
  %v648 = vpack.c.b16 %v592, %v590
  %v649 = vpack.c.b16 %v595, %v593
  %v650 = vpack.c.b16 %v596, %v594
  %v651 = vpack.c.b16 %v599, %v597
  %v652 = vpack.c.b16 %v600, %v598
  %v653 = vpack.c.b16 %v603, %v601
  %v654 = vpack.c.b16 %v604, %v602
  %v655 = vpack.c.b16 %v607, %v605
  %v656 = vpack.c.b16 %v608, %v606
  %v657 = vpack.c.b16 %v611, %v609
  %v658 = vpack.c.b16 %v612, %v610
  %v659 = vpack.c.b16 %v615, %v613
  %v660 = vpack.c.b16 %v616, %v614
  %v661 = vpack.c.b16 %v619, %v617
  %v662 = vpack.c.b16 %v620, %v618
  %v663 = vpack.c.b16 %v623, %v621
  %v664 = vpack.c.b16 %v624, %v622
  %v665 = vpack.c.b16 %v627, %v625
  %v666 = vpack.c.b16 %v628, %v626
  %v667 = vpack.c.b16 %v631, %v629
  %v668 = vpack.c.b16 %v632, %v630
  %v669 = vpack.c.b16 %v635, %v633
  %v670 = vpack.c.b16 %v636, %v634
  %v671 = vpack.c.b16 %v639, %v637
  %v672 = vpack.c.b16 %v640, %v638
  %705 = vmatprep.subr.bf16.mxu0 %v656
  %706 = vmatpush1.bf16.msra.mxu0 %v655
  %707 = vmatprep.subr.bf16.mxu0 %v654
  %708 = vmatpush1.bf16.msra.mxu0 %v653
  %709 = vmatprep.subr.bf16.mxu0 %v652
  %710 = vmatpush1.bf16.msra.mxu0 %v651
  %711 = vmatprep.subr.bf16.mxu0 %v650
  %712 = vmatpush1.bf16.msra.mxu0 %v649
  %713 = vmatprep.subr.bf16.mxu0 %v648
  %714 = vmatpush1.bf16.msra.mxu0 %v647
  %715 = vmatprep.subr.bf16.mxu0 %v646
  %716 = vmatpush1.bf16.msra.mxu0 %v645
  %717 = vmatprep.subr.bf16.mxu0 %v644
  %718 = vmatpush1.bf16.msra.mxu0 %v643
  %719 = vmatprep.subr.bf16.mxu0 %v642
  %720 = vmatpush1.bf16.msra.mxu0 %v641
  %721 = vmatprep.subr.bf16.mxu0 %v672
  %722 = vmatpush2.bf16.msra.mxu0 %v671
  %723 = vmatprep.subr.bf16.mxu0 %v670
  %724 = vmatpush2.bf16.msra.mxu0 %v669
  %725 = vmatprep.subr.bf16.mxu0 %v668
  %726 = vmatpush2.bf16.msra.mxu0 %v667
  %727 = vmatprep.subr.bf16.mxu0 %v666
  %728 = vmatpush2.bf16.msra.mxu0 %v665
  %729 = vmatprep.subr.bf16.mxu0 %v664
  %730 = vmatpush2.bf16.msra.mxu0 %v663
  %731 = vmatprep.subr.bf16.mxu0 %v662
  %732 = vmatpush2.bf16.msra.mxu0 %v661
  %733 = vmatprep.subr.bf16.mxu0 %v660
  %734 = vmatpush2.bf16.msra.mxu0 %v659
  %735 = vmatprep.subr.bf16.mxu0 %v658
  %736 = vmatpush2.bf16.msra.mxu0 %v657
  %737 = vmatprep.mubr.bf16.mxu0 %v496
  %738 = vmatmul.mubr.bf16.gmra.mxu0 %v495
  %v739 = vpop.f32.mrf.mxu0
  %v740 = vadd.f32 %v538, %v739
  %v741 = vpop.f32.mrf.mxu0
  %v742 = vadd.f32 %v542, %v741
  %v743 = vpop.f32.mrf.mxu0
  %v744 = vadd.f32 %v538, %v743
  %v745 = vpop.f32.mrf.mxu0
  %v746 = vadd.f32 %v542, %v745
  %747 = vmatprep.mubr.bf16.mxu0 %v498
  %748 = vmatmul.mubr.bf16.gmra.mxu0 %v497
  %v749 = vpop.f32.mrf.mxu0
  %v750 = vadd.f32 %v538, %v749
  %v751 = vpop.f32.mrf.mxu0
  %v752 = vadd.f32 %v542, %v751
  %v753 = vpop.f32.mrf.mxu0
  %v754 = vadd.f32 %v538, %v753
  %v755 = vpop.f32.mrf.mxu0
  %v756 = vadd.f32 %v542, %v755
  %757 = vdwg.mxu0
  %v758 = vmax.f32 %v740, 0.0
  %v759 = vmax.f32 %v742, 0.0
  %v760 = vmax.f32 %v744, 0.0
  %v761 = vmax.f32 %v746, 0.0
  %v762 = vmax.f32 %v750, 0.0
  %v763 = vmax.f32 %v752, 0.0
  %v764 = vmax.f32 %v754, 0.0
  %v765 = vmax.f32 %v756, 0.0
  %v766 = vpack.c.bf16 %v760, %v758
  %v767 = vpack.c.bf16 %v761, %v759
  %v768 = vpack.c.bf16 %v764, %v762
  %v769 = vpack.c.bf16 %v765, %v763
  %s770 = sshll.u32 %s227, 4
  %771 = dma.done %s58, %s770
  %v772 = vld [vmem:[#allocation4] sm:$0xff]
  %v773 = vld [vmem:[#allocation4 + $0x8] sm:$0xff]
  %v774 = vld [vmem:[#allocation4 + $0x10] sm:$0xff]
  %v775 = vld [vmem:[#allocation4 + $0x18] sm:$0xff]
  %v776 = vld [vmem:[#allocation4 + $0x20] sm:$0xff]
  %v777 = vld [vmem:[#allocation4 + $0x28] sm:$0xff]
  %v778 = vld [vmem:[#allocation4 + $0x30] sm:$0xff]
  %v779 = vld [vmem:[#allocation4 + $0x38] sm:$0xff]
  %v780 = vld [vmem:[#allocation4 + $0x40] sm:$0xff]
  %v781 = vld [vmem:[#allocation4 + $0x48] sm:$0xff]
  %v782 = vld [vmem:[#allocation4 + $0x50] sm:$0xff]
  %v783 = vld [vmem:[#allocation4 + $0x58] sm:$0xff]
  %v784 = vld [vmem:[#allocation4 + $0x60] sm:$0xff]
  %v785 = vld [vmem:[#allocation4 + $0x68] sm:$0xff]
  %v786 = vld [vmem:[#allocation4 + $0x70] sm:$0xff]
  %v787 = vld [vmem:[#allocation4 + $0x78] sm:$0xff]
  %v788 = vld [vmem:[#allocation4 + $0x80] sm:$0xff]
  %v789 = vld [vmem:[#allocation4 + $0x88] sm:$0xff]
  %v790 = vld [vmem:[#allocation4 + $0x90] sm:$0xff]
  %v791 = vld [vmem:[#allocation4 + $0x98] sm:$0xff]
  %v792 = vld [vmem:[#allocation4 + $0xa0] sm:$0xff]
  %v793 = vld [vmem:[#allocation4 + $0xa8] sm:$0xff]
  %v794 = vld [vmem:[#allocation4 + $0xb0] sm:$0xff]
  %v795 = vld [vmem:[#allocation4 + $0xb8] sm:$0xff]
  %v796 = vld [vmem:[#allocation4 + $0xc0] sm:$0xff]
  %v797 = vld [vmem:[#allocation4 + $0xc8] sm:$0xff]
  %v798 = vld [vmem:[#allocation4 + $0xd0] sm:$0xff]
  %v799 = vld [vmem:[#allocation4 + $0xd8] sm:$0xff]
  %v800 = vld [vmem:[#allocation4 + $0xe0] sm:$0xff]
  %v801 = vld [vmem:[#allocation4 + $0xe8] sm:$0xff]
  %v802 = vld [vmem:[#allocation4 + $0xf0] sm:$0xff]
  %v803 = vld [vmem:[#allocation4 + $0xf8] sm:$0xff]
  %v804 = vld [vmem:[%s8] sm:$0x3]
  %v806 = vlaneseq
  %v807 = vshrl.u32 %v806, 7
  %v808 = vsub.s32 0, %v807
  %v809 = vrot.slane %v804, %v808
  %v810 = vlaneseq
  %v811 = vshrl.u32 %v810, 7
  %v812 = vsub.s32 1, %v811
  %v813 = vrot.slane %v804, %v812
  %v848 = vunpack.c.l.b16 %v772
  %v849 = vunpack.c.h.b16 %v772
  %v850 = vunpack.c.l.b16 %v773
  %v851 = vunpack.c.h.b16 %v773
  %v852 = vunpack.c.l.b16 %v774
  %v853 = vunpack.c.h.b16 %v774
  %v854 = vunpack.c.l.b16 %v775
  %v855 = vunpack.c.h.b16 %v775
  %v856 = vunpack.c.l.b16 %v776
  %v857 = vunpack.c.h.b16 %v776
  %v858 = vunpack.c.l.b16 %v777
  %v859 = vunpack.c.h.b16 %v777
  %v860 = vunpack.c.l.b16 %v778
  %v861 = vunpack.c.h.b16 %v778
  %v862 = vunpack.c.l.b16 %v779
  %v863 = vunpack.c.h.b16 %v779
  %v864 = vunpack.c.l.b16 %v780
  %v865 = vunpack.c.h.b16 %v780
  %v866 = vunpack.c.l.b16 %v781
  %v867 = vunpack.c.h.b16 %v781
  %v868 = vunpack.c.l.b16 %v782
  %v869 = vunpack.c.h.b16 %v782
  %v870 = vunpack.c.l.b16 %v783
  %v871 = vunpack.c.h.b16 %v783
  %v872 = vunpack.c.l.b16 %v784
  %v873 = vunpack.c.h.b16 %v784
  %v874 = vunpack.c.l.b16 %v785
  %v875 = vunpack.c.h.b16 %v785
  %v876 = vunpack.c.l.b16 %v786
  %v877 = vunpack.c.h.b16 %v786
  %v878 = vunpack.c.l.b16 %v787
  %v879 = vunpack.c.h.b16 %v787
  %v880 = vunpack.c.l.b16 %v788
  %v881 = vunpack.c.h.b16 %v788
  %v882 = vunpack.c.l.b16 %v789
  %v883 = vunpack.c.h.b16 %v789
  %v884 = vunpack.c.l.b16 %v790
  %v885 = vunpack.c.h.b16 %v790
  %v886 = vunpack.c.l.b16 %v791
  %v887 = vunpack.c.h.b16 %v791
  %v888 = vunpack.c.l.b16 %v792
  %v889 = vunpack.c.h.b16 %v792
  %v890 = vunpack.c.l.b16 %v793
  %v891 = vunpack.c.h.b16 %v793
  %v892 = vunpack.c.l.b16 %v794
  %v893 = vunpack.c.h.b16 %v794
  %v894 = vunpack.c.l.b16 %v795
  %v895 = vunpack.c.h.b16 %v795
  %v896 = vunpack.c.l.b16 %v796
  %v897 = vunpack.c.h.b16 %v796
  %v898 = vunpack.c.l.b16 %v797
  %v899 = vunpack.c.h.b16 %v797
  %v900 = vunpack.c.l.b16 %v798
  %v901 = vunpack.c.h.b16 %v798
  %v902 = vunpack.c.l.b16 %v799
  %v903 = vunpack.c.h.b16 %v799
  %v904 = vunpack.c.l.b16 %v800
  %v905 = vunpack.c.h.b16 %v800
  %v906 = vunpack.c.l.b16 %v801
  %v907 = vunpack.c.h.b16 %v801
  %v908 = vunpack.c.l.b16 %v802
  %v909 = vunpack.c.h.b16 %v802
  %v910 = vunpack.c.l.b16 %v803
  %v911 = vunpack.c.h.b16 %v803
  %v912 = vpack.c.b16 %v850, %v848
  %v913 = vpack.c.b16 %v851, %v849
  %v914 = vpack.c.b16 %v854, %v852
  %v915 = vpack.c.b16 %v855, %v853
  %v916 = vpack.c.b16 %v858, %v856
  %v917 = vpack.c.b16 %v859, %v857
  %v918 = vpack.c.b16 %v862, %v860
  %v919 = vpack.c.b16 %v863, %v861
  %v920 = vpack.c.b16 %v866, %v864
  %v921 = vpack.c.b16 %v867, %v865
  %v922 = vpack.c.b16 %v870, %v868
  %v923 = vpack.c.b16 %v871, %v869
  %v924 = vpack.c.b16 %v874, %v872
  %v925 = vpack.c.b16 %v875, %v873
  %v926 = vpack.c.b16 %v878, %v876
  %v927 = vpack.c.b16 %v879, %v877
  %v928 = vpack.c.b16 %v882, %v880
  %v929 = vpack.c.b16 %v883, %v881
  %v930 = vpack.c.b16 %v886, %v884
  %v931 = vpack.c.b16 %v887, %v885
  %v932 = vpack.c.b16 %v890, %v888
  %v933 = vpack.c.b16 %v891, %v889
  %v934 = vpack.c.b16 %v894, %v892
  %v935 = vpack.c.b16 %v895, %v893
  %v936 = vpack.c.b16 %v898, %v896
  %v937 = vpack.c.b16 %v899, %v897
  %v938 = vpack.c.b16 %v902, %v900
  %v939 = vpack.c.b16 %v903, %v901
  %v940 = vpack.c.b16 %v906, %v904
  %v941 = vpack.c.b16 %v907, %v905
  %v942 = vpack.c.b16 %v910, %v908
  %v943 = vpack.c.b16 %v911, %v909
  %976 = vmatprep.subr.bf16.mxu0 %v927
  %977 = vmatpush1.bf16.msra.mxu0 %v926
  %978 = vmatprep.subr.bf16.mxu0 %v925
  %979 = vmatpush1.bf16.msra.mxu0 %v924
  %980 = vmatprep.subr.bf16.mxu0 %v923
  %981 = vmatpush1.bf16.msra.mxu0 %v922
  %982 = vmatprep.subr.bf16.mxu0 %v921
  %983 = vmatpush1.bf16.msra.mxu0 %v920
  %984 = vmatprep.subr.bf16.mxu0 %v919
  %985 = vmatpush1.bf16.msra.mxu0 %v918
  %986 = vmatprep.subr.bf16.mxu0 %v917
  %987 = vmatpush1.bf16.msra.mxu0 %v916
  %988 = vmatprep.subr.bf16.mxu0 %v915
  %989 = vmatpush1.bf16.msra.mxu0 %v914
  %990 = vmatprep.subr.bf16.mxu0 %v913
  %991 = vmatpush1.bf16.msra.mxu0 %v912
  %992 = vmatprep.subr.bf16.mxu0 %v943
  %993 = vmatpush2.bf16.msra.mxu0 %v942
  %994 = vmatprep.subr.bf16.mxu0 %v941
  %995 = vmatpush2.bf16.msra.mxu0 %v940
  %996 = vmatprep.subr.bf16.mxu0 %v939
  %997 = vmatpush2.bf16.msra.mxu0 %v938
  %998 = vmatprep.subr.bf16.mxu0 %v937
  %999 = vmatpush2.bf16.msra.mxu0 %v936
  %1000 = vmatprep.subr.bf16.mxu0 %v935
  %1001 = vmatpush2.bf16.msra.mxu0 %v934
  %1002 = vmatprep.subr.bf16.mxu0 %v933
  %1003 = vmatpush2.bf16.msra.mxu0 %v932
  %1004 = vmatprep.subr.bf16.mxu0 %v931
  %1005 = vmatpush2.bf16.msra.mxu0 %v930
  %1006 = vmatprep.subr.bf16.mxu0 %v929
  %1007 = vmatpush2.bf16.msra.mxu0 %v928
  %1008 = vmatprep.mubr.bf16.mxu0 %v767
  %1009 = vmatmul.mubr.bf16.gmra.mxu0 %v766
  %v1010 = vpop.f32.mrf.mxu0
  %v1011 = vadd.f32 %v809, %v1010
  %v1012 = vpop.f32.mrf.mxu0
  %v1013 = vadd.f32 %v813, %v1012
  %v1014 = vpop.f32.mrf.mxu0
  %v1015 = vadd.f32 %v809, %v1014
  %v1016 = vpop.f32.mrf.mxu0
  %v1017 = vadd.f32 %v813, %v1016
  %1018 = vmatprep.mubr.bf16.mxu0 %v769
  %1019 = vmatmul.mubr.bf16.gmra.mxu0 %v768
  %v1020 = vpop.f32.mrf.mxu0
  %v1021 = vadd.f32 %v809, %v1020
  %v1022 = vpop.f32.mrf.mxu0
  %v1023 = vadd.f32 %v813, %v1022
  %v1024 = vpop.f32.mrf.mxu0
  %v1025 = vadd.f32 %v809, %v1024
  %v1026 = vpop.f32.mrf.mxu0
  %v1027 = vadd.f32 %v813, %v1026
  %1028 = vdwg.mxu0
  %v1029 = vmax.f32 %v1011, 0.0
  %v1030 = vmax.f32 %v1013, 0.0
  %v1031 = vmax.f32 %v1015, 0.0
  %v1032 = vmax.f32 %v1017, 0.0
  %v1033 = vmax.f32 %v1021, 0.0
  %v1034 = vmax.f32 %v1023, 0.0
  %v1035 = vmax.f32 %v1025, 0.0
  %v1036 = vmax.f32 %v1027, 0.0
  %v1037 = vpack.c.bf16 %v1031, %v1029
  %v1038 = vpack.c.bf16 %v1032, %v1030
  %v1039 = vpack.c.bf16 %v1035, %v1033
  %v1040 = vpack.c.bf16 %v1036, %v1034
  %s1041 = sshll.u32 %s227, 4
  %1042 = dma.done %s70, %s1041
  %v1043 = vld [vmem:[#allocation5] sm:$0xff]
  %v1044 = vld [vmem:[#allocation5 + $0x8] sm:$0xff]
  %v1045 = vld [vmem:[#allocation5 + $0x10] sm:$0xff]
  %v1046 = vld [vmem:[#allocation5 + $0x18] sm:$0xff]
  %v1047 = vld [vmem:[#allocation5 + $0x20] sm:$0xff]
  %v1048 = vld [vmem:[#allocation5 + $0x28] sm:$0xff]
  %v1049 = vld [vmem:[#allocation5 + $0x30] sm:$0xff]
  %v1050 = vld [vmem:[#allocation5 + $0x38] sm:$0xff]
  %v1051 = vld [vmem:[#allocation5 + $0x40] sm:$0xff]
  %v1052 = vld [vmem:[#allocation5 + $0x48] sm:$0xff]
  %v1053 = vld [vmem:[#allocation5 + $0x50] sm:$0xff]
  %v1054 = vld [vmem:[#allocation5 + $0x58] sm:$0xff]
  %v1055 = vld [vmem:[#allocation5 + $0x60] sm:$0xff]
  %v1056 = vld [vmem:[#allocation5 + $0x68] sm:$0xff]
  %v1057 = vld [vmem:[#allocation5 + $0x70] sm:$0xff]
  %v1058 = vld [vmem:[#allocation5 + $0x78] sm:$0xff]
  %v1059 = vld [vmem:[#allocation5 + $0x80] sm:$0xff]
  %v1060 = vld [vmem:[#allocation5 + $0x88] sm:$0xff]
  %v1061 = vld [vmem:[#allocation5 + $0x90] sm:$0xff]
  %v1062 = vld [vmem:[#allocation5 + $0x98] sm:$0xff]
  %v1063 = vld [vmem:[#allocation5 + $0xa0] sm:$0xff]
  %v1064 = vld [vmem:[#allocation5 + $0xa8] sm:$0xff]
  %v1065 = vld [vmem:[#allocation5 + $0xb0] sm:$0xff]
  %v1066 = vld [vmem:[#allocation5 + $0xb8] sm:$0xff]
  %v1067 = vld [vmem:[#allocation5 + $0xc0] sm:$0xff]
  %v1068 = vld [vmem:[#allocation5 + $0xc8] sm:$0xff]
  %v1069 = vld [vmem:[#allocation5 + $0xd0] sm:$0xff]
  %v1070 = vld [vmem:[#allocation5 + $0xd8] sm:$0xff]
  %v1071 = vld [vmem:[#allocation5 + $0xe0] sm:$0xff]
  %v1072 = vld [vmem:[#allocation5 + $0xe8] sm:$0xff]
  %v1073 = vld [vmem:[#allocation5 + $0xf0] sm:$0xff]
  %v1074 = vld [vmem:[#allocation5 + $0xf8] sm:$0xff]
  %v1075 = vld [vmem:[%s10] sm:$0x3]
  %v1077 = vlaneseq
  %v1078 = vshrl.u32 %v1077, 7
  %v1079 = vsub.s32 0, %v1078
  %v1080 = vrot.slane %v1075, %v1079
  %v1081 = vlaneseq
  %v1082 = vshrl.u32 %v1081, 7
  %v1083 = vsub.s32 1, %v1082
  %v1084 = vrot.slane %v1075, %v1083
  %v1119 = vunpack.c.l.b16 %v1043
  %v1120 = vunpack.c.h.b16 %v1043
  %v1121 = vunpack.c.l.b16 %v1044
  %v1122 = vunpack.c.h.b16 %v1044
  %v1123 = vunpack.c.l.b16 %v1045
  %v1124 = vunpack.c.h.b16 %v1045
  %v1125 = vunpack.c.l.b16 %v1046
  %v1126 = vunpack.c.h.b16 %v1046
  %v1127 = vunpack.c.l.b16 %v1047
  %v1128 = vunpack.c.h.b16 %v1047
  %v1129 = vunpack.c.l.b16 %v1048
  %v1130 = vunpack.c.h.b16 %v1048
  %v1131 = vunpack.c.l.b16 %v1049
  %v1132 = vunpack.c.h.b16 %v1049
  %v1133 = vunpack.c.l.b16 %v1050
  %v1134 = vunpack.c.h.b16 %v1050
  %v1135 = vunpack.c.l.b16 %v1051
  %v1136 = vunpack.c.h.b16 %v1051
  %v1137 = vunpack.c.l.b16 %v1052
  %v1138 = vunpack.c.h.b16 %v1052
  %v1139 = vunpack.c.l.b16 %v1053
  %v1140 = vunpack.c.h.b16 %v1053
  %v1141 = vunpack.c.l.b16 %v1054
  %v1142 = vunpack.c.h.b16 %v1054
  %v1143 = vunpack.c.l.b16 %v1055
  %v1144 = vunpack.c.h.b16 %v1055
  %v1145 = vunpack.c.l.b16 %v1056
  %v1146 = vunpack.c.h.b16 %v1056
  %v1147 = vunpack.c.l.b16 %v1057
  %v1148 = vunpack.c.h.b16 %v1057
  %v1149 = vunpack.c.l.b16 %v1058
  %v1150 = vunpack.c.h.b16 %v1058
  %v1151 = vunpack.c.l.b16 %v1059
  %v1152 = vunpack.c.h.b16 %v1059
  %v1153 = vunpack.c.l.b16 %v1060
  %v1154 = vunpack.c.h.b16 %v1060
  %v1155 = vunpack.c.l.b16 %v1061
  %v1156 = vunpack.c.h.b16 %v1061
  %v1157 = vunpack.c.l.b16 %v1062
  %v1158 = vunpack.c.h.b16 %v1062
  %v1159 = vunpack.c.l.b16 %v1063
  %v1160 = vunpack.c.h.b16 %v1063
  %v1161 = vunpack.c.l.b16 %v1064
  %v1162 = vunpack.c.h.b16 %v1064
  %v1163 = vunpack.c.l.b16 %v1065
  %v1164 = vunpack.c.h.b16 %v1065
  %v1165 = vunpack.c.l.b16 %v1066
  %v1166 = vunpack.c.h.b16 %v1066
  %v1167 = vunpack.c.l.b16 %v1067
  %v1168 = vunpack.c.h.b16 %v1067
  %v1169 = vunpack.c.l.b16 %v1068
  %v1170 = vunpack.c.h.b16 %v1068
  %v1171 = vunpack.c.l.b16 %v1069
  %v1172 = vunpack.c.h.b16 %v1069
  %v1173 = vunpack.c.l.b16 %v1070
  %v1174 = vunpack.c.h.b16 %v1070
  %v1175 = vunpack.c.l.b16 %v1071
  %v1176 = vunpack.c.h.b16 %v1071
  %v1177 = vunpack.c.l.b16 %v1072
  %v1178 = vunpack.c.h.b16 %v1072
  %v1179 = vunpack.c.l.b16 %v1073
  %v1180 = vunpack.c.h.b16 %v1073
  %v1181 = vunpack.c.l.b16 %v1074
  %v1182 = vunpack.c.h.b16 %v1074
  %v1183 = vpack.c.b16 %v1121, %v1119
  %v1184 = vpack.c.b16 %v1122, %v1120
  %v1185 = vpack.c.b16 %v1125, %v1123
  %v1186 = vpack.c.b16 %v1126, %v1124
  %v1187 = vpack.c.b16 %v1129, %v1127
  %v1188 = vpack.c.b16 %v1130, %v1128
  %v1189 = vpack.c.b16 %v1133, %v1131
  %v1190 = vpack.c.b16 %v1134, %v1132
  %v1191 = vpack.c.b16 %v1137, %v1135
  %v1192 = vpack.c.b16 %v1138, %v1136
  %v1193 = vpack.c.b16 %v1141, %v1139
  %v1194 = vpack.c.b16 %v1142, %v1140
  %v1195 = vpack.c.b16 %v1145, %v1143
  %v1196 = vpack.c.b16 %v1146, %v1144
  %v1197 = vpack.c.b16 %v1149, %v1147
  %v1198 = vpack.c.b16 %v1150, %v1148
  %v1199 = vpack.c.b16 %v1153, %v1151
  %v1200 = vpack.c.b16 %v1154, %v1152
  %v1201 = vpack.c.b16 %v1157, %v1155
  %v1202 = vpack.c.b16 %v1158, %v1156
  %v1203 = vpack.c.b16 %v1161, %v1159
  %v1204 = vpack.c.b16 %v1162, %v1160
  %v1205 = vpack.c.b16 %v1165, %v1163
  %v1206 = vpack.c.b16 %v1166, %v1164
  %v1207 = vpack.c.b16 %v1169, %v1167
  %v1208 = vpack.c.b16 %v1170, %v1168
  %v1209 = vpack.c.b16 %v1173, %v1171
  %v1210 = vpack.c.b16 %v1174, %v1172
  %v1211 = vpack.c.b16 %v1177, %v1175
  %v1212 = vpack.c.b16 %v1178, %v1176
  %v1213 = vpack.c.b16 %v1181, %v1179
  %v1214 = vpack.c.b16 %v1182, %v1180
  %1247 = vmatprep.subr.bf16.mxu0 %v1198
  %1248 = vmatpush1.bf16.msra.mxu0 %v1197
  %1249 = vmatprep.subr.bf16.mxu0 %v1196
  %1250 = vmatpush1.bf16.msra.mxu0 %v1195
  %1251 = vmatprep.subr.bf16.mxu0 %v1194
  %1252 = vmatpush1.bf16.msra.mxu0 %v1193
  %1253 = vmatprep.subr.bf16.mxu0 %v1192
  %1254 = vmatpush1.bf16.msra.mxu0 %v1191
  %1255 = vmatprep.subr.bf16.mxu0 %v1190
  %1256 = vmatpush1.bf16.msra.mxu0 %v1189
  %1257 = vmatprep.subr.bf16.mxu0 %v1188
  %1258 = vmatpush1.bf16.msra.mxu0 %v1187
  %1259 = vmatprep.subr.bf16.mxu0 %v1186
  %1260 = vmatpush1.bf16.msra.mxu0 %v1185
  %1261 = vmatprep.subr.bf16.mxu0 %v1184
  %1262 = vmatpush1.bf16.msra.mxu0 %v1183
  %1263 = vmatprep.subr.bf16.mxu0 %v1214
  %1264 = vmatpush2.bf16.msra.mxu0 %v1213
  %1265 = vmatprep.subr.bf16.mxu0 %v1212
  %1266 = vmatpush2.bf16.msra.mxu0 %v1211
  %1267 = vmatprep.subr.bf16.mxu0 %v1210
  %1268 = vmatpush2.bf16.msra.mxu0 %v1209
  %1269 = vmatprep.subr.bf16.mxu0 %v1208
  %1270 = vmatpush2.bf16.msra.mxu0 %v1207
  %1271 = vmatprep.subr.bf16.mxu0 %v1206
  %1272 = vmatpush2.bf16.msra.mxu0 %v1205
  %1273 = vmatprep.subr.bf16.mxu0 %v1204
  %1274 = vmatpush2.bf16.msra.mxu0 %v1203
  %1275 = vmatprep.subr.bf16.mxu0 %v1202
  %1276 = vmatpush2.bf16.msra.mxu0 %v1201
  %1277 = vmatprep.subr.bf16.mxu0 %v1200
  %1278 = vmatpush2.bf16.msra.mxu0 %v1199
  %1279 = vmatprep.mubr.bf16.mxu0 %v1038
  %1280 = vmatmul.mubr.bf16.gmra.mxu0 %v1037
  %v1281 = vpop.f32.mrf.mxu0
  %v1282 = vadd.f32 %v1080, %v1281
  %v1283 = vpop.f32.mrf.mxu0
  %v1284 = vadd.f32 %v1084, %v1283
  %v1285 = vpop.f32.mrf.mxu0
  %v1286 = vadd.f32 %v1080, %v1285
  %v1287 = vpop.f32.mrf.mxu0
  %v1288 = vadd.f32 %v1084, %v1287
  %1289 = vmatprep.mubr.bf16.mxu0 %v1040
  %1290 = vmatmul.mubr.bf16.gmra.mxu0 %v1039
  %v1291 = vpop.f32.mrf.mxu0
  %v1292 = vadd.f32 %v1080, %v1291
  %v1293 = vpop.f32.mrf.mxu0
  %v1294 = vadd.f32 %v1084, %v1293
  %v1295 = vpop.f32.mrf.mxu0
  %v1296 = vadd.f32 %v1080, %v1295
  %v1297 = vpop.f32.mrf.mxu0
  %v1298 = vadd.f32 %v1084, %v1297
  %1299 = vdwg.mxu0
  %v1300 = vmax.f32 %v1282, 0.0
  %v1301 = vmax.f32 %v1284, 0.0
  %v1302 = vmax.f32 %v1286, 0.0
  %v1303 = vmax.f32 %v1288, 0.0
  %v1304 = vmax.f32 %v1292, 0.0
  %v1305 = vmax.f32 %v1294, 0.0
  %v1306 = vmax.f32 %v1296, 0.0
  %v1307 = vmax.f32 %v1298, 0.0
  %v1308 = vpack.c.bf16 %v1302, %v1300
  %v1309 = vpack.c.bf16 %v1303, %v1301
  %v1310 = vpack.c.bf16 %v1306, %v1304
  %v1311 = vpack.c.bf16 %v1307, %v1305
  %s1312 = smul.u32 %s226, 1
  %s1313 = sshll.u32 %s1312, 4
  %1314 = dma.done %s82, %s1313
  %v1315 = vld [vmem:[#allocation6] sm:$0xf]
  %v1316 = vld [vmem:[#allocation6 + $0x4] sm:$0xf]
  %v1317 = vld [vmem:[#allocation6 + $0x8] sm:$0xf]
  %v1318 = vld [vmem:[#allocation6 + $0xc] sm:$0xf]
  %v1319 = vld [vmem:[#allocation6 + $0x10] sm:$0xf]
  %v1320 = vld [vmem:[#allocation6 + $0x14] sm:$0xf]
  %v1321 = vld [vmem:[#allocation6 + $0x18] sm:$0xf]
  %v1322 = vld [vmem:[#allocation6 + $0x1c] sm:$0xf]
  %v1323 = vld [vmem:[#allocation6 + $0x20] sm:$0xf]
  %v1324 = vld [vmem:[#allocation6 + $0x24] sm:$0xf]
  %v1325 = vld [vmem:[#allocation6 + $0x28] sm:$0xf]
  %v1326 = vld [vmem:[#allocation6 + $0x2c] sm:$0xf]
  %v1327 = vld [vmem:[#allocation6 + $0x30] sm:$0xf]
  %v1328 = vld [vmem:[#allocation6 + $0x34] sm:$0xf]
  %v1329 = vld [vmem:[#allocation6 + $0x38] sm:$0xf]
  %v1330 = vld [vmem:[#allocation6 + $0x3c] sm:$0xf]
  %v1331 = vld [vmem:[#allocation6 + $0x40] sm:$0xf]
  %v1332 = vld [vmem:[#allocation6 + $0x44] sm:$0xf]
  %v1333 = vld [vmem:[#allocation6 + $0x48] sm:$0xf]
  %v1334 = vld [vmem:[#allocation6 + $0x4c] sm:$0xf]
  %v1335 = vld [vmem:[#allocation6 + $0x50] sm:$0xf]
  %v1336 = vld [vmem:[#allocation6 + $0x54] sm:$0xf]
  %v1337 = vld [vmem:[#allocation6 + $0x58] sm:$0xf]
  %v1338 = vld [vmem:[#allocation6 + $0x5c] sm:$0xf]
  %v1339 = vld [vmem:[#allocation6 + $0x60] sm:$0xf]
  %v1340 = vld [vmem:[#allocation6 + $0x64] sm:$0xf]
  %v1341 = vld [vmem:[#allocation6 + $0x68] sm:$0xf]
  %v1342 = vld [vmem:[#allocation6 + $0x6c] sm:$0xf]
  %v1343 = vld [vmem:[#allocation6 + $0x70] sm:$0xf]
  %v1344 = vld [vmem:[#allocation6 + $0x74] sm:$0xf]
  %v1345 = vld [vmem:[#allocation6 + $0x78] sm:$0xf]
  %v1346 = vld [vmem:[#allocation6 + $0x7c] sm:$0xf]
  %v1347 = vld [vmem:[%s12] sm:$0x1]
  %v1349 = vlaneseq
  %v1350 = vshrl.u32 %v1349, 7
  %v1351 = vsub.s32 0, %v1350
  %v1352 = vrot.slane %v1347, %v1351
  %v1386 = vunpack.c.l.b16 %v1315
  %v1387 = vunpack.c.l.b16 %v1316
  %v1388 = vunpack.c.l.b16 %v1317
  %v1389 = vunpack.c.l.b16 %v1318
  %v1390 = vunpack.c.l.b16 %v1319
  %v1391 = vunpack.c.l.b16 %v1320
  %v1392 = vunpack.c.l.b16 %v1321
  %v1393 = vunpack.c.l.b16 %v1322
  %v1394 = vunpack.c.l.b16 %v1323
  %v1395 = vunpack.c.l.b16 %v1324
  %v1396 = vunpack.c.l.b16 %v1325
  %v1397 = vunpack.c.l.b16 %v1326
  %v1398 = vunpack.c.l.b16 %v1327
  %v1399 = vunpack.c.l.b16 %v1328
  %v1400 = vunpack.c.l.b16 %v1329
  %v1401 = vunpack.c.l.b16 %v1330
  %v1402 = vunpack.c.l.b16 %v1331
  %v1403 = vunpack.c.l.b16 %v1332
  %v1404 = vunpack.c.l.b16 %v1333
  %v1405 = vunpack.c.l.b16 %v1334
  %v1406 = vunpack.c.l.b16 %v1335
  %v1407 = vunpack.c.l.b16 %v1336
  %v1408 = vunpack.c.l.b16 %v1337
  %v1409 = vunpack.c.l.b16 %v1338
  %v1410 = vunpack.c.l.b16 %v1339
  %v1411 = vunpack.c.l.b16 %v1340
  %v1412 = vunpack.c.l.b16 %v1341
  %v1413 = vunpack.c.l.b16 %v1342
  %v1414 = vunpack.c.l.b16 %v1343
  %v1415 = vunpack.c.l.b16 %v1344
  %v1416 = vunpack.c.l.b16 %v1345
  %v1417 = vunpack.c.l.b16 %v1346
  %v1418 = vpack.c.b16 %v1387, %v1386
  %v1419 = vpack.c.b16 %v1389, %v1388
  %v1420 = vpack.c.b16 %v1391, %v1390
  %v1421 = vpack.c.b16 %v1393, %v1392
  %v1422 = vpack.c.b16 %v1395, %v1394
  %v1423 = vpack.c.b16 %v1397, %v1396
  %v1424 = vpack.c.b16 %v1399, %v1398
  %v1425 = vpack.c.b16 %v1401, %v1400
  %v1426 = vpack.c.b16 %v1403, %v1402
  %v1427 = vpack.c.b16 %v1405, %v1404
  %v1428 = vpack.c.b16 %v1407, %v1406
  %v1429 = vpack.c.b16 %v1409, %v1408
  %v1430 = vpack.c.b16 %v1411, %v1410
  %v1431 = vpack.c.b16 %v1413, %v1412
  %v1432 = vpack.c.b16 %v1415, %v1414
  %v1433 = vpack.c.b16 %v1417, %v1416
  %1450 = vmatprep.subr.bf16.mxu0 0
  %1451 = vmatpush1.bf16.msra.mxu0 %v1425
  %1452 = vmatprep.subr.bf16.mxu0 0
  %1453 = vmatpush1.bf16.msra.mxu0 %v1424
  %1454 = vmatprep.subr.bf16.mxu0 0
  %1455 = vmatpush1.bf16.msra.mxu0 %v1423
  %1456 = vmatprep.subr.bf16.mxu0 0
  %1457 = vmatpush1.bf16.msra.mxu0 %v1422
  %1458 = vmatprep.subr.bf16.mxu0 0
  %1459 = vmatpush1.bf16.msra.mxu0 %v1421
  %1460 = vmatprep.subr.bf16.mxu0 0
  %1461 = vmatpush1.bf16.msra.mxu0 %v1420
  %1462 = vmatprep.subr.bf16.mxu0 0
  %1463 = vmatpush1.bf16.msra.mxu0 %v1419
  %1464 = vmatprep.subr.bf16.mxu0 0
  %1465 = vmatpush1.bf16.msra.mxu0 %v1418
  %1466 = vmatprep.subr.bf16.mxu0 0
  %1467 = vmatpush2.bf16.msra.mxu0 %v1433
  %1468 = vmatprep.subr.bf16.mxu0 0
  %1469 = vmatpush2.bf16.msra.mxu0 %v1432
  %1470 = vmatprep.subr.bf16.mxu0 0
  %1471 = vmatpush2.bf16.msra.mxu0 %v1431
  %1472 = vmatprep.subr.bf16.mxu0 0
  %1473 = vmatpush2.bf16.msra.mxu0 %v1430
  %1474 = vmatprep.subr.bf16.mxu0 0
  %1475 = vmatpush2.bf16.msra.mxu0 %v1429
  %1476 = vmatprep.subr.bf16.mxu0 0
  %1477 = vmatpush2.bf16.msra.mxu0 %v1428
  %1478 = vmatprep.subr.bf16.mxu0 0
  %1479 = vmatpush2.bf16.msra.mxu0 %v1427
  %1480 = vmatprep.subr.bf16.mxu0 0
  %1481 = vmatpush2.bf16.msra.mxu0 %v1426
  %1482 = vmatprep.mubr.bf16.mxu0 %v1309
  %1483 = vmatmul.mubr.bf16.gmra.mxu0 %v1308
  %v1484 = vpop.f32.mrf.mxu0
  %v1485 = vadd.f32 %v1352, %v1484
  %v1486 = vpop.f32.mrf.mxu0
  %v1487 = vpop.f32.mrf.mxu0
  %v1488 = vadd.f32 %v1352, %v1487
  %v1489 = vpop.f32.mrf.mxu0
  %1490 = vmatprep.mubr.bf16.mxu0 %v1311
  %1491 = vmatmul.mubr.bf16.gmra.mxu0 %v1310
  %v1492 = vpop.f32.mrf.mxu0
  %v1493 = vadd.f32 %v1352, %v1492
  %v1494 = vpop.f32.mrf.mxu0
  %v1495 = vpop.f32.mrf.mxu0
  %v1496 = vadd.f32 %v1352, %v1495
  %v1497 = vpop.f32.mrf.mxu0
  %1498 = vdwg.mxu0
  %1499 = vst [vmem:[%s13] sm:$0xff] %v1485
  %1500 = vst [vmem:[%s13 + $0x8] sm:$0xff] %v1488
  %1501 = vst [vmem:[%s13 + $0x10] sm:$0xff] %v1493
  %1502 = vst [vmem:[%s13 + $0x18] sm:$0xff] %v1496
  // Predicated region
  $region54: #{dqn_forward.1} parent=0 // pred_check
    _
  $region55: #{dqn_forward.1} parent=0 // pred_check_branch
    %1504 = sbr.rel (0) target = $region57
  $region56: #{dqn_forward.1} parent=0 // pred_region
    _
  $region57: #{dqn_forward.1} parent=0 // pred_fallthru
    _
  // Predicated region
  $region58: #{dqn_forward.1} parent=0 // pred_check
    _
  $region59: #{dqn_forward.1} parent=0 // pred_check_branch
    %1506 = sbr.rel (0) target = $region61
  $region60: #{dqn_forward.1} parent=0 // pred_region
    _
  $region61: #{dqn_forward.1} parent=0 // pred_fallthru
    _
  %1507 = vsyncmov [#allocation7]
  %s1508 = vpop.sfrf %1507
  %p1509 = scmp.eq.s32.totalorder %s1508, 0
  %p1510 = pneg %p1509
  %1512 = shalt.err (%p1510)
  %s1513 = scalar_lea.sflag [#allocation7], 1
  %1514 = vsyncmov %s1513
  %s1515 = vpop.sfrf %1514
  %p1516 = scmp.eq.s32.totalorder %s1515, 0
  %p1517 = pneg %p1516
  %1519 = shalt.err (%p1517)
  %s1520 = scalar_lea.sflag [#allocation7], 2
  %1521 = vsyncmov %s1520
  %s1522 = vpop.sfrf %1521
  %p1523 = scmp.eq.s32.totalorder %s1522, 0
  %p1524 = pneg %p1523
  %1526 = shalt.err (%p1524)
  %s1527 = scalar_lea.sflag [#allocation7], 3
  %1528 = vsyncmov %s1527
  %s1529 = vpop.sfrf %1528
  %p1530 = scmp.eq.s32.totalorder %s1529, 0
  %p1531 = pneg %p1530
  %1533 = shalt.err (%p1531)
  %s1534 = scalar_lea.sflag [#allocation7], 4
  %1535 = vsyncmov %s1534
  %s1536 = vpop.sfrf %1535
  %p1537 = scmp.eq.s32.totalorder %s1536, 0
  %p1538 = pneg %p1537
  %1540 = shalt.err (%p1538)

</llo_original>
